<compile_context>
chip_gen: v7x
topology: tpu7x:2x2x1
jax: 0.10.0
libtpu: 0.0.40
codegen_flags: <defaults>
</compile_context>

<pallas_src>
import functools

import jax
import jax.numpy as jnp
from jax import lax
from jax.experimental import pallas as pl
from jax.experimental.pallas import tpu as pltpu


def _meanpool_conv_kernel(x_ref, w_ref, b_ref, o_ref, *,
                          nb, Hp, Wp, Cin, Cout, K, pad, Ho, Wo):
    """Fused 2x2 mean-pool + same-padding conv for a block of `nb` images.

    x_ref : (nb, 2*Hp, Wp, 2*Cin)  raw input; W-pairs folded into the lane dim
    w_ref : (K, K, Cin, Cout)      bf16 conv weight, pre-scaled by 1/4
    b_ref : (1, Cout)              f32 conv bias
    o_ref : (nb, Cout, Ho*Wo)      channels-major output (lane dim = fused spatial)
    """
    f32 = jnp.float32

    # --- 2x2 sum-pool (the /4 is folded into w_ref). -------------------------
    # H-pairs: free split of a leading dim; W-pairs: lane-slice adds (VPU only,
    # no strided sublane access).
    x = x_ref[...].reshape(nb, Hp, 2, Wp, 2 * Cin)
    pooled = (x[:, :, 0, :, :Cin].astype(f32) + x[:, :, 0, :, Cin:].astype(f32) +
              x[:, :, 1, :, :Cin].astype(f32) + x[:, :, 1, :, Cin:].astype(f32))
    pooled = pooled.astype(jnp.bfloat16)            # MXU operand dtype

    # --- zero-pad H/W as a value: no scratch, no per-step masked halo stores. -
    if pad > 0:
        zr = jnp.zeros((nb, pad, Wp, Cin), jnp.bfloat16)
        pooled = jnp.concatenate([zr, pooled, zr], axis=1)
        zc = jnp.zeros((nb, Hp + 2 * pad, pad, Cin), jnp.bfloat16)
        pooled = jnp.concatenate([zc, pooled, zc], axis=2)

    # --- conv = K*K shift-and-accumulate MXU matmuls (no im2col tensor). -----
    M = nb * Ho * Wo
    w = w_ref[...]                                  # (K, K, Cin, Cout) bf16
    acc = jnp.zeros((M, Cout), f32)
    for kh in range(K):
        for kw in range(K):
            xk = pooled[:, kh:kh + Ho, kw:kw + Wo, :].reshape(M, Cin)
            acc = acc + jnp.dot(xk, w[kh, kw], preferred_element_type=f32)
    acc = acc + b_ref[...].astype(f32)              # bias once, post-matmul

    # --- store channels-major: fused spatial axis in the lane dim, and the
    #     result is already NCHW (no wrapper-side output transpose).
    o = jnp.swapaxes(acc.reshape(nb, Ho * Wo, Cout), 1, 2)
    o_ref[...] = o.astype(o_ref.dtype)


def _pick_batch_block(n, m_per_image, target_m=256):
    """Largest-M batch block that still leaves >=2 grid steps (2 TCs on v7x)."""
    cands = [d for d in range(1, n + 1) if n % d == 0 and (n // d >= 2 or n == 1)]
    if not cands:
        cands = [n]
    good = [d for d in cands if d * m_per_image >= target_m]
    return min(good) if good else max(cands)


def mean_pool_conv(x_nchw, w_oihw, b):
    """x_nchw: (N, Cin, H, W); w_oihw: (Cout, Cin, K, K); b: (Cout,). Returns NCHW."""
    N, Cin, H, W = x_nchw.shape
    Cout, Cin2, K, K2 = w_oihw.shape
    assert Cin == Cin2 and K == K2
    assert H % 2 == 0 and W % 2 == 0
    Hp, Wp = H // 2, W // 2
    p = (K - 1) // 2
    Ho = Hp + 2 * p - K + 1
    Wo = Wp + 2 * p - K + 1

    # Layout glue only (native dtype, no f32 upcast): NCHW -> NHWC, then fold
    # W-pairs into the lane dim so the in-kernel pool needs no strided loads.
    x = jnp.transpose(x_nchw, (0, 2, 3, 1)).reshape(N, H, Wp, 2 * Cin)
    # Weight OIHW -> (K, K, Cin, Cout); mean-pool /4 folded in (exact in bf16).
    w_pack = (jnp.transpose(w_oihw, (2, 3, 1, 0)) * 0.25).astype(jnp.bfloat16)
    b2 = b.reshape(1, Cout).astype(jnp.float32)

    nb = _pick_batch_block(N, Ho * Wo)
    grid = (N // nb,)

    kernel = functools.partial(
        _meanpool_conv_kernel,
        nb=nb, Hp=Hp, Wp=Wp, Cin=Cin, Cout=Cout, K=K, pad=p, Ho=Ho, Wo=Wo)

    out = pl.pallas_call(
        kernel,
        out_shape=jax.ShapeDtypeStruct((N, Cout, Ho * Wo), x_nchw.dtype),
        grid_spec=pltpu.PrefetchScalarGridSpec(
            num_scalar_prefetch=0,
            grid=grid,
            in_specs=[
                pl.BlockSpec((nb, H, Wp, 2 * Cin), lambda i: (i, 0, 0, 0)),
                # Constant block index -> weights/bias stay VMEM-resident; not
                # re-DMA'd per grid step.
                pl.BlockSpec((K, K, Cin, Cout), lambda i: (0, 0, 0, 0)),
                pl.BlockSpec((1, Cout), lambda i: (0, 0)),
            ],
            out_specs=pl.BlockSpec((nb, Cout, Ho * Wo), lambda i: (i, 0, 0)),
        ),
        compiler_params=pltpu.CompilerParams(
            dimension_semantics=("parallel",)),
    )(x, w_pack, b2)

    # (N, Cout, Ho*Wo) is already channels-first; final reshape is free.
    return out.reshape(N, Cout, Ho, Wo)


if __name__ == "__main__":
    # Small shapes consistent with the module: n_input=4, n_output=8, k_size=3.
    N, Cin, H, W = 2, 4, 16, 16
    Cout, K = 8, 3

    key = jax.random.PRNGKey(0)
    kx, kw, kb = jax.random.split(key, 3)
    x = jax.random.normal(kx, (N, Cin, H, W), dtype=jnp.float32)
    # Deterministic synthetic Conv2d parameters (PyTorch shapes: OIHW weight, (Cout,) bias).
    fan_in = Cin * K * K
    w = jax.random.uniform(kw, (Cout, Cin, K, K), jnp.float32,
                           minval=-1.0, maxval=1.0) / jnp.sqrt(fan_in)
    b = jax.random.uniform(kb, (Cout,), jnp.float32,
                           minval=-1.0, maxval=1.0) / jnp.sqrt(fan_in)

    out = jax.block_until_ready(mean_pool_conv(x, w, b))

    # Reference in plain JAX (NCHW, matching the PyTorch module exactly, f32).
    pooled = (x[:, :, ::2, ::2] + x[:, :, 1::2, ::2] +
              x[:, :, ::2, 1::2] + x[:, :, 1::2, 1::2]) / 4.0
    p = (K - 1) // 2
    ref = lax.conv_general_dilated(
        pooled, w, window_strides=(1, 1), padding=[(p, p), (p, p)],
        dimension_numbers=("NCHW", "OIHW", "NCHW"),
        precision=lax.Precision.HIGHEST) + b.reshape(1, Cout, 1, 1)

    assert out.shape == ref.shape, (out.shape, ref.shape)
    # bf16 MXU operands (f32 accumulation) -> looser tolerance than pure f32.
    assert jnp.allclose(out, ref, atol=2e-2, rtol=2e-2), \
        float(jnp.max(jnp.abs(out - ref)))
    print("KERNEL_OK")
</pallas_src>

<mosaic_0001>
module attributes {stable_mosaic.version = 11 : i64} {
  func.func @_meanpool_conv_kernel(%arg0: i32, %arg1: memref<1x16x8x8xf32, #tpu.memory_space<vmem>>, %arg2: memref<3x3x4x8xbf16, #tpu.memory_space<vmem>>, %arg3: memref<1x8xf32, #tpu.memory_space<vmem>>, %arg4: memref<1x8x64xf32, #tpu.memory_space<vmem>>) attributes {dimension_semantics = [#tpu.dimension_semantics<parallel>], iteration_bounds = array<i64: 2>, scalar_prefetch = 0 : i64, scratch_operands = 0 : i64, tpu.core_type = #tpu.core_type<tc>, window_params = [{transform_indices = @transform_0, window_bounds = array<i64: 1, 16, 8, 8>}, {pipeline_mode = #tpu.pipeline_mode<synchronous>, transform_indices = @transform_1, window_bounds = array<i64: 3, 3, 4, 8>}, {pipeline_mode = #tpu.pipeline_mode<synchronous>, transform_indices = @transform_2, window_bounds = array<i64: 1, 8>}, {transform_indices = @transform_3, window_bounds = array<i64: 1, 8, 64>}]} {
    %c0 = arith.constant 0 : index
    %c0_0 = arith.constant 0 : index
    %c0_1 = arith.constant 0 : index
    %c0_2 = arith.constant 0 : index
    %0 = vector.load %arg1[%c0, %c0_0, %c0_1, %c0_2] : memref<1x16x8x8xf32, #tpu.memory_space<vmem>>, vector<1x16x8x8xf32>
    %1 = vector.shape_cast %0 : vector<1x16x8x8xf32> to vector<1x8x2x8x8xf32>
    %2 = vector.extract_strided_slice %1 {offsets = [0, 0, 0, 0, 0], sizes = [1, 8, 1, 8, 4], strides = [1, 1, 1, 1, 1]} : vector<1x8x2x8x8xf32> to vector<1x8x1x8x4xf32>
    %3 = vector.shape_cast %2 : vector<1x8x1x8x4xf32> to vector<1x8x8x4xf32>
    %4 = vector.extract_strided_slice %1 {offsets = [0, 0, 0, 0, 4], sizes = [1, 8, 1, 8, 4], strides = [1, 1, 1, 1, 1]} : vector<1x8x2x8x8xf32> to vector<1x8x1x8x4xf32>
    %5 = vector.shape_cast %4 : vector<1x8x1x8x4xf32> to vector<1x8x8x4xf32>
    %6 = arith.addf %3, %5 : vector<1x8x8x4xf32>
    %7 = vector.extract_strided_slice %1 {offsets = [0, 0, 1, 0, 0], sizes = [1, 8, 1, 8, 4], strides = [1, 1, 1, 1, 1]} : vector<1x8x2x8x8xf32> to vector<1x8x1x8x4xf32>
    %8 = vector.shape_cast %7 : vector<1x8x1x8x4xf32> to vector<1x8x8x4xf32>
    %9 = arith.addf %6, %8 : vector<1x8x8x4xf32>
    %10 = vector.extract_strided_slice %1 {offsets = [0, 0, 1, 0, 4], sizes = [1, 8, 1, 8, 4], strides = [1, 1, 1, 1, 1]} : vector<1x8x2x8x8xf32> to vector<1x8x1x8x4xf32>
    %11 = vector.shape_cast %10 : vector<1x8x1x8x4xf32> to vector<1x8x8x4xf32>
    %12 = arith.addf %9, %11 : vector<1x8x8x4xf32>
    %13 = arith.truncf %12 : vector<1x8x8x4xf32> to vector<1x8x8x4xbf16>
    %cst = arith.constant 0.000000e+00 : bf16
    %14 = vector.broadcast %cst : bf16 to vector<1x1x8x4xbf16>
    %15 = tpu.concatenate %14, %13, %14 in 1 : vector<1x1x8x4xbf16>, vector<1x8x8x4xbf16>, vector<1x1x8x4xbf16> -> vector<1x10x8x4xbf16>
    %cst_3 = arith.constant 0.000000e+00 : bf16
    %16 = vector.broadcast %cst_3 : bf16 to vector<1x10x1x4xbf16>
    %17 = tpu.concatenate %16, %15, %16 in 2 : vector<1x10x1x4xbf16>, vector<1x10x8x4xbf16>, vector<1x10x1x4xbf16> -> vector<1x10x10x4xbf16>
    %c0_4 = arith.constant 0 : index
    %c0_5 = arith.constant 0 : index
    %c0_6 = arith.constant 0 : index
    %c0_7 = arith.constant 0 : index
    %18 = vector.load %arg2[%c0_4, %c0_5, %c0_6, %c0_7] : memref<3x3x4x8xbf16, #tpu.memory_space<vmem>>, vector<3x3x4x8xbf16>
    %cst_8 = arith.constant 0.000000e+00 : f32
    %19 = vector.broadcast %cst_8 : f32 to vector<64x8xf32>
    %20 = vector.extract_strided_slice %17 {offsets = [0, 0, 0, 0], sizes = [1, 8, 8, 4], strides = [1, 1, 1, 1]} : vector<1x10x10x4xbf16> to vector<1x8x8x4xbf16>
    %21 = vector.shape_cast %20 : vector<1x8x8x4xbf16> to vector<64x4xbf16>
    %22 = vector.extract_strided_slice %18 {offsets = [0, 0, 0, 0], sizes = [1, 1, 4, 8], strides = [1, 1, 1, 1]} : vector<3x3x4x8xbf16> to vector<1x1x4x8xbf16>
    %23 = vector.shape_cast %22 : vector<1x1x4x8xbf16> to vector<4x8xbf16>
    %cst_9 = arith.constant dense<0.000000e+00> : vector<64x8xf32>
    %24 = tpu.matmul %21, %23, %cst_9 {dimension_numbers = #tpu.dot_dimension_numbers<[1], [0], [0], [1], [0, 0, 1, 1], [], []>} : vector<64x4xbf16>, vector<4x8xbf16>, vector<64x8xf32> -> vector<64x8xf32>
    %25 = arith.addf %19, %24 : vector<64x8xf32>
    %26 = vector.extract_strided_slice %17 {offsets = [0, 0, 1, 0], sizes = [1, 8, 8, 4], strides = [1, 1, 1, 1]} : vector<1x10x10x4xbf16> to vector<1x8x8x4xbf16>
    %27 = vector.shape_cast %26 : vector<1x8x8x4xbf16> to vector<64x4xbf16>
    %28 = vector.extract_strided_slice %18 {offsets = [0, 1, 0, 0], sizes = [1, 1, 4, 8], strides = [1, 1, 1, 1]} : vector<3x3x4x8xbf16> to vector<1x1x4x8xbf16>
    %29 = vector.shape_cast %28 : vector<1x1x4x8xbf16> to vector<4x8xbf16>
    %cst_10 = arith.constant dense<0.000000e+00> : vector<64x8xf32>
    %30 = tpu.matmul %27, %29, %cst_10 {dimension_numbers = #tpu.dot_dimension_numbers<[1], [0], [0], [1], [0, 0, 1, 1], [], []>} : vector<64x4xbf16>, vector<4x8xbf16>, vector<64x8xf32> -> vector<64x8xf32>
    %31 = arith.addf %25, %30 : vector<64x8xf32>
    %32 = vector.extract_strided_slice %17 {offsets = [0, 0, 2, 0], sizes = [1, 8, 8, 4], strides = [1, 1, 1, 1]} : vector<1x10x10x4xbf16> to vector<1x8x8x4xbf16>
    %33 = vector.shape_cast %32 : vector<1x8x8x4xbf16> to vector<64x4xbf16>
    %34 = vector.extract_strided_slice %18 {offsets = [0, 2, 0, 0], sizes = [1, 1, 4, 8], strides = [1, 1, 1, 1]} : vector<3x3x4x8xbf16> to vector<1x1x4x8xbf16>
    %35 = vector.shape_cast %34 : vector<1x1x4x8xbf16> to vector<4x8xbf16>
    %cst_11 = arith.constant dense<0.000000e+00> : vector<64x8xf32>
    %36 = tpu.matmul %33, %35, %cst_11 {dimension_numbers = #tpu.dot_dimension_numbers<[1], [0], [0], [1], [0, 0, 1, 1], [], []>} : vector<64x4xbf16>, vector<4x8xbf16>, vector<64x8xf32> -> vector<64x8xf32>
    %37 = arith.addf %31, %36 : vector<64x8xf32>
    %38 = vector.extract_strided_slice %17 {offsets = [0, 1, 0, 0], sizes = [1, 8, 8, 4], strides = [1, 1, 1, 1]} : vector<1x10x10x4xbf16> to vector<1x8x8x4xbf16>
    %39 = vector.shape_cast %38 : vector<1x8x8x4xbf16> to vector<64x4xbf16>
    %40 = vector.extract_strided_slice %18 {offsets = [1, 0, 0, 0], sizes = [1, 1, 4, 8], strides = [1, 1, 1, 1]} : vector<3x3x4x8xbf16> to vector<1x1x4x8xbf16>
    %41 = vector.shape_cast %40 : vector<1x1x4x8xbf16> to vector<4x8xbf16>
    %cst_12 = arith.constant dense<0.000000e+00> : vector<64x8xf32>
    %42 = tpu.matmul %39, %41, %cst_12 {dimension_numbers = #tpu.dot_dimension_numbers<[1], [0], [0], [1], [0, 0, 1, 1], [], []>} : vector<64x4xbf16>, vector<4x8xbf16>, vector<64x8xf32> -> vector<64x8xf32>
    %43 = arith.addf %37, %42 : vector<64x8xf32>
    %44 = vector.extract_strided_slice %17 {offsets = [0, 1, 1, 0], sizes = [1, 8, 8, 4], strides = [1, 1, 1, 1]} : vector<1x10x10x4xbf16> to vector<1x8x8x4xbf16>
    %45 = vector.shape_cast %44 : vector<1x8x8x4xbf16> to vector<64x4xbf16>
    %46 = vector.extract_strided_slice %18 {offsets = [1, 1, 0, 0], sizes = [1, 1, 4, 8], strides = [1, 1, 1, 1]} : vector<3x3x4x8xbf16> to vector<1x1x4x8xbf16>
    %47 = vector.shape_cast %46 : vector<1x1x4x8xbf16> to vector<4x8xbf16>
    %cst_13 = arith.constant dense<0.000000e+00> : vector<64x8xf32>
    %48 = tpu.matmul %45, %47, %cst_13 {dimension_numbers = #tpu.dot_dimension_numbers<[1], [0], [0], [1], [0, 0, 1, 1], [], []>} : vector<64x4xbf16>, vector<4x8xbf16>, vector<64x8xf32> -> vector<64x8xf32>
    %49 = arith.addf %43, %48 : vector<64x8xf32>
    %50 = vector.extract_strided_slice %17 {offsets = [0, 1, 2, 0], sizes = [1, 8, 8, 4], strides = [1, 1, 1, 1]} : vector<1x10x10x4xbf16> to vector<1x8x8x4xbf16>
    %51 = vector.shape_cast %50 : vector<1x8x8x4xbf16> to vector<64x4xbf16>
    %52 = vector.extract_strided_slice %18 {offsets = [1, 2, 0, 0], sizes = [1, 1, 4, 8], strides = [1, 1, 1, 1]} : vector<3x3x4x8xbf16> to vector<1x1x4x8xbf16>
    %53 = vector.shape_cast %52 : vector<1x1x4x8xbf16> to vector<4x8xbf16>
    %cst_14 = arith.constant dense<0.000000e+00> : vector<64x8xf32>
    %54 = tpu.matmul %51, %53, %cst_14 {dimension_numbers = #tpu.dot_dimension_numbers<[1], [0], [0], [1], [0, 0, 1, 1], [], []>} : vector<64x4xbf16>, vector<4x8xbf16>, vector<64x8xf32> -> vector<64x8xf32>
    %55 = arith.addf %49, %54 : vector<64x8xf32>
    %56 = vector.extract_strided_slice %17 {offsets = [0, 2, 0, 0], sizes = [1, 8, 8, 4], strides = [1, 1, 1, 1]} : vector<1x10x10x4xbf16> to vector<1x8x8x4xbf16>
    %57 = vector.shape_cast %56 : vector<1x8x8x4xbf16> to vector<64x4xbf16>
    %58 = vector.extract_strided_slice %18 {offsets = [2, 0, 0, 0], sizes = [1, 1, 4, 8], strides = [1, 1, 1, 1]} : vector<3x3x4x8xbf16> to vector<1x1x4x8xbf16>
    %59 = vector.shape_cast %58 : vector<1x1x4x8xbf16> to vector<4x8xbf16>
    %cst_15 = arith.constant dense<0.000000e+00> : vector<64x8xf32>
    %60 = tpu.matmul %57, %59, %cst_15 {dimension_numbers = #tpu.dot_dimension_numbers<[1], [0], [0], [1], [0, 0, 1, 1], [], []>} : vector<64x4xbf16>, vector<4x8xbf16>, vector<64x8xf32> -> vector<64x8xf32>
    %61 = arith.addf %55, %60 : vector<64x8xf32>
    %62 = vector.extract_strided_slice %17 {offsets = [0, 2, 1, 0], sizes = [1, 8, 8, 4], strides = [1, 1, 1, 1]} : vector<1x10x10x4xbf16> to vector<1x8x8x4xbf16>
    %63 = vector.shape_cast %62 : vector<1x8x8x4xbf16> to vector<64x4xbf16>
    %64 = vector.extract_strided_slice %18 {offsets = [2, 1, 0, 0], sizes = [1, 1, 4, 8], strides = [1, 1, 1, 1]} : vector<3x3x4x8xbf16> to vector<1x1x4x8xbf16>
    %65 = vector.shape_cast %64 : vector<1x1x4x8xbf16> to vector<4x8xbf16>
    %cst_16 = arith.constant dense<0.000000e+00> : vector<64x8xf32>
    %66 = tpu.matmul %63, %65, %cst_16 {dimension_numbers = #tpu.dot_dimension_numbers<[1], [0], [0], [1], [0, 0, 1, 1], [], []>} : vector<64x4xbf16>, vector<4x8xbf16>, vector<64x8xf32> -> vector<64x8xf32>
    %67 = arith.addf %61, %66 : vector<64x8xf32>
    %68 = vector.extract_strided_slice %17 {offsets = [0, 2, 2, 0], sizes = [1, 8, 8, 4], strides = [1, 1, 1, 1]} : vector<1x10x10x4xbf16> to vector<1x8x8x4xbf16>
    %69 = vector.shape_cast %68 : vector<1x8x8x4xbf16> to vector<64x4xbf16>
    %70 = vector.extract_strided_slice %18 {offsets = [2, 2, 0, 0], sizes = [1, 1, 4, 8], strides = [1, 1, 1, 1]} : vector<3x3x4x8xbf16> to vector<1x1x4x8xbf16>
    %71 = vector.shape_cast %70 : vector<1x1x4x8xbf16> to vector<4x8xbf16>
    %cst_17 = arith.constant dense<0.000000e+00> : vector<64x8xf32>
    %72 = tpu.matmul %69, %71, %cst_17 {dimension_numbers = #tpu.dot_dimension_numbers<[1], [0], [0], [1], [0, 0, 1, 1], [], []>} : vector<64x4xbf16>, vector<4x8xbf16>, vector<64x8xf32> -> vector<64x8xf32>
    %73 = arith.addf %67, %72 : vector<64x8xf32>
    %c0_18 = arith.constant 0 : index
    %c0_19 = arith.constant 0 : index
    %74 = vector.load %arg3[%c0_18, %c0_19] : memref<1x8xf32, #tpu.memory_space<vmem>>, vector<1x8xf32>
    %75 = vector.broadcast %74 : vector<1x8xf32> to vector<64x8xf32>
    %76 = arith.addf %73, %75 : vector<64x8xf32>
    %77 = vector.shape_cast %76 : vector<64x8xf32> to vector<1x64x8xf32>
    %78 = tpu.transpose %77, [0, 2, 1] : vector<1x64x8xf32> -> vector<1x8x64xf32>
    %c0_20 = arith.constant 0 : index
    %c0_21 = arith.constant 0 : index
    %c0_22 = arith.constant 0 : index
    %79 = vector.load %arg4[%c0_20, %c0_21, %c0_22] : memref<1x8x64xf32, #tpu.memory_space<vmem>>, vector<1x8x64xf32>
    tpu.vector_store %arg4[%c0_20, %c0_21, %c0_22], %78 {strides = array<i32>} : memref<1x8x64xf32, #tpu.memory_space<vmem>>, vector<1x8x64xf32>,
    return
  }
  func.func @transform_0(%arg0: i32) -> (i32, i32, i32, i32) {
    %c0_i32 = arith.constant 0 : i32
    %c0_i32_0 = arith.constant 0 : i32
    %c0_i32_1 = arith.constant 0 : i32
    %c0_i32_2 = arith.constant 0 : i32
    return %arg0, %c0_i32, %c0_i32_0, %c0_i32_1 : i32, i32, i32, i32
  }
  func.func @transform_1(%arg0: i32) -> (i32, i32, i32, i32) {
    %c0_i32 = arith.constant 0 : i32
    %c0_i32_0 = arith.constant 0 : i32
    %c0_i32_1 = arith.constant 0 : i32
    %c0_i32_2 = arith.constant 0 : i32
    %c0_i32_3 = arith.constant 0 : i32
    return %c0_i32, %c0_i32_0, %c0_i32_1, %c0_i32_2 : i32, i32, i32, i32
  }
  func.func @transform_2(%arg0: i32) -> (i32, i32) {
    %c0_i32 = arith.constant 0 : i32
    %c0_i32_0 = arith.constant 0 : i32
    %c0_i32_1 = arith.constant 0 : i32
    return %c0_i32, %c0_i32_0 : i32, i32
  }
  func.func @transform_3(%arg0: i32) -> (i32, i32, i32) {
    %c0_i32 = arith.constant 0 : i32
    %c0_i32_0 = arith.constant 0 : i32
    %c0_i32_1 = arith.constant 0 : i32
    return %arg0, %c0_i32, %c0_i32_0 : i32, i32, i32
  }
}

</mosaic_0001>

<llo_original>
// kernel: tpu_custom_call.1
$region0: #{tpu_custom_call.1}
  #allocation0 [shape = 'u32[]', space=smem, size = 0x4, offset = 0x4, fixed_abs, tag = 'smem constant byte address 0x4 - core index']
  #allocation1 [shape = 'u32[144,128]{1,0:T(1,128)}', space=vmem, size = 0x12000, scoped, tag = 'internal scratch']
  %s0 = inlined_call_operand.vmem [shape: f32[2,16,8,8], index: 0, kind: input, shape index: {}]
  %s1 = inlined_call_operand.vmem [shape: bf16[3,3,4,8], index: 1, kind: input, shape index: {}]
  %s2 = inlined_call_operand.vmem [shape: f32[1,8], index: 2, kind: input, shape index: {}]
  %s3 = inlined_call_operand.hbm [shape: f32[2,8,64], index: 3, kind: output, shape index: {}]
  %s4 = sld [smem:[#allocation0]]
  $region45: #{tpu_custom_call.1} parent=0
    _
  %s6 = ssub.s32 1, %s4
  %s7 = scalar_select 0, %s6, %s4
  $region1: #{tpu_custom_call.1} parent=0
    #allocation2 [shape = 'u8[8192]{0}', space=vmem, size = 0x2000, scoped, tag = 'output window, operand 0']
    #allocation3 [shape = 's32[2]{0}', space=sflag, size = 0x8, scoped, tag = 'scoped memory for tpu_custom_call.1']
    %8 = vsyncpa [#allocation3], 0
    %s9 = scalar_lea.sflag [#allocation3], 1
    %10 = vsyncpa %s9, 0
    loop: start=0, step=1, limit=4
    $region2: #{tpu_custom_call.1} parent=1 // loop_pre_header
      _
    $region3: #{tpu_custom_call.1} parent=1 // loop_header
      %s12 = sphi 0, %s16
      %p13 = scmp.ge.s32.totalorder %s12, 4
      %s22 = sphi 0, %s24
      %s25 = sphi 0, %s22
      %s26 = sphi 0, %s25
      %s42 = sphi 0, %s26
      %s46 = sphi 0, %s46
      %s48 = sphi 0, %s46
      %s49 = sphi 0, %s48
      %s63 = sphi 0, %s49
      %s67 = sphi 0, %s67
      %s69 = sphi 0, %s67
      %s70 = sphi 0, %s69
      %s84 = sphi 0, %s70
      %s90 = sphi 0, %s92
      %s93 = sphi 0, %s90
      %s94 = sphi 0, %s93
      %s110 = sphi 0, %s94
    $region4: #{tpu_custom_call.1} parent=1 // loop_header_branch
      %15 = sbr.rel (%p13) target = $region8
    $region5: #{tpu_custom_call.1} parent=1 // loop_body
      %s17 = ssub.s32 %s12, 1
      %s18 = ssub.s32 %s12, 2
      %s19 = sadd.s32 %s12, 1
      %s20 = ssub.s32 %s12, %s19
      %p21 = scmp.eq.s32.totalorder %s20, 0
      %s23 = sadd.s32 %s22, 1
      %s24 = scalar_select %p21, %s22, %s23
      %p27 = pneg %p21
      %p28 = scmp.eq.s32.totalorder %s12, 1
      %p29 = por %p27, %p28
      %p30 = scmp.ne.s32.totalorder %s22, %s25
      %p31 = scmp.eq.s32.totalorder %s12, 0
      %p32 = por %p30, %p31
      %p33 = scmp.ne.s32.totalorder %s22, %s25
      %p34 = scmp.eq.s32.totalorder %s17, 1
      %p35 = por %p33, %p34
      %p36 = scmp.ne.s32.totalorder %s25, %s26
      %p37 = scmp.eq.s32.totalorder %s17, 0
      %p38 = por %p36, %p37
      %p39 = scmp.ne.s32.totalorder %s25, %s26
      %p40 = scmp.eq.s32.totalorder %s18, 1
      %p41 = por %p39, %p40
      %p43 = scmp.ne.s32.totalorder %s26, %s42
      %p44 = scmp.eq.s32.totalorder %s18, 0
      %p45 = por %p43, %p44
      %s47 = sadd.s32 %s46, 1
      %p50 = scmp.eq.s32.totalorder %s12, 1
      %p51 = scmp.ne.s32.totalorder %s46, %s48
      %p52 = scmp.eq.s32.totalorder %s12, 0
      %p53 = por %p51, %p52
      %p54 = scmp.ne.s32.totalorder %s46, %s48
      %p55 = scmp.eq.s32.totalorder %s17, 1
      %p56 = por %p54, %p55
      %p57 = scmp.ne.s32.totalorder %s48, %s49
      %p58 = scmp.eq.s32.totalorder %s17, 0
      %p59 = por %p57, %p58
      %p60 = scmp.ne.s32.totalorder %s48, %s49
      %p61 = scmp.eq.s32.totalorder %s18, 1
      %p62 = por %p60, %p61
      %p64 = scmp.ne.s32.totalorder %s49, %s63
      %p65 = scmp.eq.s32.totalorder %s18, 0
      %p66 = por %p64, %p65
      %s68 = sadd.s32 %s67, 1
      %p71 = scmp.eq.s32.totalorder %s12, 1
      %p72 = scmp.ne.s32.totalorder %s67, %s69
      %p73 = scmp.eq.s32.totalorder %s12, 0
      %p74 = por %p72, %p73
      %p75 = scmp.ne.s32.totalorder %s67, %s69
      %p76 = scmp.eq.s32.totalorder %s17, 1
      %p77 = por %p75, %p76
      %p78 = scmp.ne.s32.totalorder %s69, %s70
      %p79 = scmp.eq.s32.totalorder %s17, 0
      %p80 = por %p78, %p79
      %p81 = scmp.ne.s32.totalorder %s69, %s70
      %p82 = scmp.eq.s32.totalorder %s18, 1
      %p83 = por %p81, %p82
      %p85 = scmp.ne.s32.totalorder %s70, %s84
      %p86 = scmp.eq.s32.totalorder %s18, 0
      %p87 = por %p85, %p86
      %s88 = ssub.s32 %s12, %s19
      %p89 = scmp.eq.s32.totalorder %s88, 0
      %s91 = sadd.s32 %s90, 1
      %s92 = scalar_select %p89, %s90, %s91
      %p95 = pneg %p89
      %p96 = scmp.eq.s32.totalorder %s12, 1
      %p97 = por %p95, %p96
      %p98 = scmp.ne.s32.totalorder %s90, %s93
      %p99 = scmp.eq.s32.totalorder %s12, 0
      %p100 = por %p98, %p99
      %p101 = scmp.ne.s32.totalorder %s90, %s93
      %p102 = scmp.eq.s32.totalorder %s17, 1
      %p103 = por %p101, %p102
      %p104 = scmp.ne.s32.totalorder %s93, %s94
      %p105 = scmp.eq.s32.totalorder %s17, 0
      %p106 = por %p104, %p105
      %p107 = scmp.ne.s32.totalorder %s93, %s94
      %p108 = scmp.eq.s32.totalorder %s18, 1
      %p109 = por %p107, %p108
      %p111 = scmp.ne.s32.totalorder %s94, %s110
      %p112 = scmp.eq.s32.totalorder %s18, 0
      %p113 = por %p111, %p112
      %p114 = scmp.le.s32.totalorder 1, %s12
      %p115 = scmp.lt.s32.totalorder %s12, 3
      %p116 = pnand %p114, %p115
      %p117 = pneg %p116
      // Predicated region
      $region9: #{tpu_custom_call.1} parent=5 // pred_check
        _
      $region10: #{tpu_custom_call.1} parent=5 // pred_check_branch
        %119 = sbr.rel (%p116) target = $region12
      $region11: #{tpu_custom_call.1} parent=5 // pred_region
        %s120 = ssub.s32 %s12, 1
        // Predicated region
        $region13: #{tpu_custom_call.1} parent=11 // pred_check
          %p121 = pneg %p59
        $region14: #{tpu_custom_call.1} parent=11 // pred_check_branch
          %123 = sbr.rel (%p121) target = $region16
        $region15: #{tpu_custom_call.1} parent=11 // pred_region
          _
        $region16: #{tpu_custom_call.1} parent=11 // pred_fallthru
          _
        // Predicated region
        $region17: #{tpu_custom_call.1} parent=11 // pred_check
          %p124 = pneg %p80
        $region18: #{tpu_custom_call.1} parent=11 // pred_check_branch
          %126 = sbr.rel (%p124) target = $region20
        $region19: #{tpu_custom_call.1} parent=11 // pred_region
          _
        $region20: #{tpu_custom_call.1} parent=11 // pred_fallthru
          _
      $region12: #{tpu_custom_call.1} parent=5 // pred_fallthru
        _
      %p127 = scmp.lt.s32.totalorder %s12, 2
      // Predicated region
      $region21: #{tpu_custom_call.1} parent=5 // pred_check
        %p128 = pneg %p127
      $region22: #{tpu_custom_call.1} parent=5 // pred_check_branch
        %130 = sbr.rel (%p128) target = $region24
      $region23: #{tpu_custom_call.1} parent=5 // pred_region
        // Predicated region
        $region25: #{tpu_custom_call.1} parent=23 // pred_check
          %p131 = pneg %p32
        $region26: #{tpu_custom_call.1} parent=23 // pred_check_branch
          %133 = sbr.rel (%p131) target = $region28
        $region27: #{tpu_custom_call.1} parent=23 // pred_region
          %p134 = scmp.lt.s32.totalorder %s12, 1
          %s135 = scalar_select %p134, %s12, 1
          %s136 = smul.addr %s135, 16
          %s137 = smul.addr %s136, 8
          %s138 = scalar_lea.vmem %s0, %s137
        $region28: #{tpu_custom_call.1} parent=23 // pred_fallthru
          _
      $region24: #{tpu_custom_call.1} parent=5 // pred_fallthru
        _
      %p139 = scmp.le.s32.totalorder 1, %s12
      %p140 = scmp.lt.s32.totalorder %s12, 3
      %p141 = pnand %p139, %p140
      %p142 = pneg %p141
      // Predicated region
      $region29: #{tpu_custom_call.1} parent=5 // pred_check
        _
      $region30: #{tpu_custom_call.1} parent=5 // pred_check_branch
        %144 = sbr.rel (%p141) target = $region32
      $region31: #{tpu_custom_call.1} parent=5 // pred_region
        %s145 = ssub.s32 %s12, 1
        %p146 = scmp.lt.s32.totalorder %s17, 1
        %s147 = scalar_select %p146, %s17, 1
        %s148 = smul.addr %s147, 16
        %s149 = smul.addr %s148, 8
        %s150 = scalar_lea.vmem %s0, %s149
        %p151 = pneg %p38
        %p152 = pneg %p35
        %p153 = pneg %p59
        %p154 = pneg %p56
        %p155 = pneg %p80
        %p156 = pneg %p77
        %p157 = pneg %p106
        %p158 = pneg %p103
        %s159 = sand.u32 %s93, 1
        %s160 = scalar_lea.sflag [#allocation3], %s159
        %s161 = sand.u32 %s93, 1
        %s162 = smul.addr %s161, 8
        %s163 = scalar_lea.vmem [#allocation2], %s162
        %p164 = scmp.lt.s32.totalorder %s17, 1
        %s165 = scalar_select %p164, %s17, 1
        %s166 = smul.addr %s165, 16
        %s167 = smul.addr %s166, 8
        %s168 = scalar_lea.vmem %s0, %s167
        %v170 = vld [vmem:[%s168] sm:$0xff]
        %v171 = vld [vmem:[%s168 + $0x8] sm:$0xff]
        %v172 = vld [vmem:[%s168 + $0x10] sm:$0xff]
        %v173 = vld [vmem:[%s168 + $0x18] sm:$0xff]
        %v174 = vld [vmem:[%s168 + $0x20] sm:$0xff]
        %v175 = vld [vmem:[%s168 + $0x28] sm:$0xff]
        %v176 = vld [vmem:[%s168 + $0x30] sm:$0xff]
        %v177 = vld [vmem:[%s168 + $0x38] sm:$0xff]
        %v178 = vld [vmem:[%s168 + $0x40] sm:$0xff]
        %v179 = vld [vmem:[%s168 + $0x48] sm:$0xff]
        %v180 = vld [vmem:[%s168 + $0x50] sm:$0xff]
        %v181 = vld [vmem:[%s168 + $0x58] sm:$0xff]
        %v182 = vld [vmem:[%s168 + $0x60] sm:$0xff]
        %v183 = vld [vmem:[%s168 + $0x68] sm:$0xff]
        %v184 = vld [vmem:[%s168 + $0x70] sm:$0xff]
        %v185 = vld [vmem:[%s168 + $0x78] sm:$0xff]
        %194 = vrot.lane.b32.xlu0 %v170, 124
        %v195 = vpop.permute.xlu0 %194
        %196 = vrot.lane.b32.xlu0 %v172, 124
        %v197 = vpop.permute.xlu0 %196
        %198 = vrot.lane.b32.xlu0 %v174, 124
        %v199 = vpop.permute.xlu0 %198
        %200 = vrot.lane.b32.xlu0 %v176, 124
        %v201 = vpop.permute.xlu0 %200
        %202 = vrot.lane.b32.xlu0 %v178, 124
        %v203 = vpop.permute.xlu0 %202
        %204 = vrot.lane.b32.xlu0 %v180, 124
        %v205 = vpop.permute.xlu0 %204
        %206 = vrot.lane.b32.xlu0 %v182, 124
        %v207 = vpop.permute.xlu0 %206
        %208 = vrot.lane.b32.xlu0 %v184, 124
        %v209 = vpop.permute.xlu0 %208
        %v218 = vadd.f32 %v170, %v195
        %v219 = vadd.f32 %v172, %v197
        %v220 = vadd.f32 %v174, %v199
        %v221 = vadd.f32 %v176, %v201
        %v222 = vadd.f32 %v178, %v203
        %v223 = vadd.f32 %v180, %v205
        %v224 = vadd.f32 %v182, %v207
        %v225 = vadd.f32 %v184, %v209
        %v226 = vadd.f32 %v218, %v171
        %v227 = vadd.f32 %v219, %v173
        %v228 = vadd.f32 %v220, %v175
        %v229 = vadd.f32 %v221, %v177
        %v230 = vadd.f32 %v222, %v179
        %v231 = vadd.f32 %v223, %v181
        %v232 = vadd.f32 %v224, %v183
        %v233 = vadd.f32 %v225, %v185
        %242 = vrot.lane.b32.xlu0 %v171, 124
        %v243 = vpop.permute.xlu0 %242
        %244 = vrot.lane.b32.xlu0 %v173, 124
        %v245 = vpop.permute.xlu0 %244
        %246 = vrot.lane.b32.xlu0 %v175, 124
        %v247 = vpop.permute.xlu0 %246
        %248 = vrot.lane.b32.xlu0 %v177, 124
        %v249 = vpop.permute.xlu0 %248
        %250 = vrot.lane.b32.xlu0 %v179, 124
        %v251 = vpop.permute.xlu0 %250
        %252 = vrot.lane.b32.xlu0 %v181, 124
        %v253 = vpop.permute.xlu0 %252
        %254 = vrot.lane.b32.xlu0 %v183, 124
        %v255 = vpop.permute.xlu0 %254
        %256 = vrot.lane.b32.xlu0 %v185, 124
        %v257 = vpop.permute.xlu0 %256
        %v266 = vadd.f32 %v226, %v243
        %v267 = vadd.f32 %v227, %v245
        %v268 = vadd.f32 %v228, %v247
        %v269 = vadd.f32 %v229, %v249
        %v270 = vadd.f32 %v230, %v251
        %v271 = vadd.f32 %v231, %v253
        %v272 = vadd.f32 %v232, %v255
        %v273 = vadd.f32 %v233, %v257
        %v274 = vpack.c.bf16 %v266, %v266
        %v275 = vpack.c.bf16 %v267, %v267
        %v276 = vpack.c.bf16 %v268, %v268
        %v277 = vpack.c.bf16 %v269, %v269
        %v278 = vpack.c.bf16 %v270, %v270
        %v279 = vpack.c.bf16 %v271, %v271
        %v280 = vpack.c.bf16 %v272, %v272
        %v281 = vpack.c.bf16 %v273, %v273
        %v283 = vshrl.u32 0, 16
        %v285 = vrot.slane %v283, 7
        %v286 = vshll.u32 0, 16
        %v288 = vor.u32 %v285, %v286
        %v290 = vshrl.u32 %v274, 16
        %v292 = vrot.slane %v290, 7
        %v293 = vshll.u32 %v274, 16
        %v295 = vor.u32 %v292, %v293
        %v297 = vshrl.u32 %v275, 16
        %v299 = vrot.slane %v297, 7
        %v300 = vshll.u32 %v275, 16
        %v302 = vor.u32 %v299, %v300
        %v304 = vshrl.u32 %v276, 16
        %v306 = vrot.slane %v304, 7
        %v307 = vshll.u32 %v276, 16
        %v309 = vor.u32 %v306, %v307
        %v311 = vshrl.u32 %v277, 16
        %v313 = vrot.slane %v311, 7
        %v314 = vshll.u32 %v277, 16
        %v316 = vor.u32 %v313, %v314
        %v318 = vshrl.u32 %v278, 16
        %v320 = vrot.slane %v318, 7
        %v321 = vshll.u32 %v278, 16
        %v323 = vor.u32 %v320, %v321
        %v325 = vshrl.u32 %v279, 16
        %v327 = vrot.slane %v325, 7
        %v328 = vshll.u32 %v279, 16
        %v330 = vor.u32 %v327, %v328
        %v332 = vshrl.u32 %v280, 16
        %v334 = vrot.slane %v332, 7
        %v335 = vshll.u32 %v280, 16
        %v337 = vor.u32 %v334, %v335
        %v339 = vshrl.u32 %v281, 16
        %v341 = vrot.slane %v339, 7
        %v342 = vshll.u32 %v281, 16
        %v344 = vor.u32 %v341, %v342
        %vm354 = vcmask 1040384
        %vm355 = vsmask.f32 256
        %vm356 = vmand %vm354, %vm355
        %v357 = vsel %vm356, 0, %v288
        %v358 = vsel %vm356, 0, %v295
        %v359 = vsel %vm356, 0, %v302
        %v360 = vsel %vm356, 0, %v309
        %v361 = vsel %vm356, 0, %v316
        %v362 = vsel %vm356, 0, %v323
        %v363 = vsel %vm356, 0, %v330
        %v364 = vsel %vm356, 0, %v337
        %v365 = vsel %vm356, 0, %v344
        %vm366 = vcmask 1044480
        %vm367 = vsmask.f32 4352
        %vm368 = vmand %vm366, %vm367
        %v369 = vsel %vm368, %v357, 0
        %v370 = vsel %vm368, %v358, 0
        %v371 = vsel %vm368, %v359, 0
        %v372 = vsel %vm368, %v360, 0
        %v373 = vsel %vm368, %v361, 0
        %v374 = vsel %vm368, %v362, 0
        %v375 = vsel %vm368, %v363, 0
        %v376 = vsel %vm368, %v364, 0
        %v377 = vsel %vm368, %v365, 0
        %v378 = vld [vmem:[%s1] sm:$0x3]
        %v379 = vld [vmem:[%s1 + $0x2] sm:$0x3]
        %v380 = vld [vmem:[%s1 + $0x4] sm:$0x3]
        %v381 = vld [vmem:[%s1 + $0x6] sm:$0x3]
        %v382 = vld [vmem:[%s1 + $0x8] sm:$0x3]
        %v383 = vld [vmem:[%s1 + $0xa] sm:$0x3]
        %v384 = vld [vmem:[%s1 + $0xc] sm:$0x3]
        %v385 = vld [vmem:[%s1 + $0xe] sm:$0x3]
        %v386 = vld [vmem:[%s1 + $0x10] sm:$0x3]
        %v395 = vunpack.c.l.b16 %v369
        %v396 = vunpack.c.h.b16 %v369
        %v397 = vunpack.c.l.b16 %v370
        %v398 = vunpack.c.h.b16 %v370
        %v399 = vunpack.c.l.b16 %v371
        %v400 = vunpack.c.h.b16 %v371
        %v401 = vunpack.c.l.b16 %v372
        %v402 = vunpack.c.h.b16 %v372
        %v403 = vunpack.c.l.b16 %v373
        %v404 = vunpack.c.h.b16 %v373
        %v405 = vunpack.c.l.b16 %v374
        %v406 = vunpack.c.h.b16 %v374
        %v407 = vunpack.c.l.b16 %v375
        %v408 = vunpack.c.h.b16 %v375
        %v409 = vunpack.c.l.b16 %v376
        %v410 = vunpack.c.h.b16 %v376
        %v411 = vpack.c.b16 %v395, %v395
        %v412 = vpack.c.b16 %v396, %v396
        %v413 = vpack.c.b16 %v397, %v397
        %v414 = vpack.c.b16 %v398, %v398
        %v415 = vpack.c.b16 %v399, %v399
        %v416 = vpack.c.b16 %v400, %v400
        %v417 = vpack.c.b16 %v401, %v401
        %v418 = vpack.c.b16 %v402, %v402
        %v419 = vpack.c.b16 %v403, %v403
        %v420 = vpack.c.b16 %v404, %v404
        %v421 = vpack.c.b16 %v405, %v405
        %v422 = vpack.c.b16 %v406, %v406
        %v423 = vpack.c.b16 %v407, %v407
        %v424 = vpack.c.b16 %v408, %v408
        %v425 = vpack.c.b16 %v409, %v409
        %v426 = vpack.c.b16 %v410, %v410
        %vm427 = vsmask.f32 3328
        %vm428 = vsmask.f32 7440
        %vm429 = vmor %vm427, %vm428
        %v431 = vshrl.u32 %v411, 16
        %v433 = vrot.slane %v431, 4
        %v434 = vshll.u32 %v411, 16
        %v436 = vrot.slane %v434, 5
        %v437 = vor.u32 %v433, %v436
        %v438 = vrot.slane %v437, 4
        %v440 = vshll.u32 %v412, 16
        %v442 = vrot.slane %v440, 5
        %v443 = vsel %vm429, %v438, %v442
        %v445 = vshrl.u32 %v413, 16
        %v447 = vrot.slane %v445, 4
        %v448 = vshll.u32 %v413, 16
        %v450 = vrot.slane %v448, 5
        %v451 = vor.u32 %v447, %v450
        %v452 = vrot.slane %v451, 4
        %v454 = vshll.u32 %v414, 16
        %v456 = vrot.slane %v454, 5
        %v457 = vsel %vm429, %v452, %v456
        %v459 = vshrl.u32 %v415, 16
        %v461 = vrot.slane %v459, 4
        %v462 = vshll.u32 %v415, 16
        %v464 = vrot.slane %v462, 5
        %v465 = vor.u32 %v461, %v464
        %v466 = vrot.slane %v465, 4
        %v468 = vshll.u32 %v416, 16
        %v470 = vrot.slane %v468, 5
        %v471 = vsel %vm429, %v466, %v470
        %v473 = vshrl.u32 %v417, 16
        %v475 = vrot.slane %v473, 4
        %v476 = vshll.u32 %v417, 16
        %v478 = vrot.slane %v476, 5
        %v479 = vor.u32 %v475, %v478
        %v480 = vrot.slane %v479, 4
        %v482 = vshll.u32 %v418, 16
        %v484 = vrot.slane %v482, 5
        %v485 = vsel %vm429, %v480, %v484
        %v487 = vshrl.u32 %v419, 16
        %v489 = vrot.slane %v487, 4
        %v490 = vshll.u32 %v419, 16
        %v492 = vrot.slane %v490, 5
        %v493 = vor.u32 %v489, %v492
        %v494 = vrot.slane %v493, 4
        %v496 = vshll.u32 %v420, 16
        %v498 = vrot.slane %v496, 5
        %v499 = vsel %vm429, %v494, %v498
        %v501 = vshrl.u32 %v421, 16
        %v503 = vrot.slane %v501, 4
        %v504 = vshll.u32 %v421, 16
        %v506 = vrot.slane %v504, 5
        %v507 = vor.u32 %v503, %v506
        %v508 = vrot.slane %v507, 4
        %v510 = vshll.u32 %v422, 16
        %v512 = vrot.slane %v510, 5
        %v513 = vsel %vm429, %v508, %v512
        %v515 = vshrl.u32 %v423, 16
        %v517 = vrot.slane %v515, 4
        %v518 = vshll.u32 %v423, 16
        %v520 = vrot.slane %v518, 5
        %v521 = vor.u32 %v517, %v520
        %v522 = vrot.slane %v521, 4
        %v524 = vshll.u32 %v424, 16
        %v526 = vrot.slane %v524, 5
        %v527 = vsel %vm429, %v522, %v526
        %v529 = vshrl.u32 %v425, 16
        %v531 = vrot.slane %v529, 4
        %v532 = vshll.u32 %v425, 16
        %v534 = vrot.slane %v532, 5
        %v535 = vor.u32 %v531, %v534
        %v536 = vrot.slane %v535, 4
        %v538 = vshll.u32 %v426, 16
        %v540 = vrot.slane %v538, 5
        %v541 = vsel %vm429, %v536, %v540
        %v542 = vunpack.c.l.b16 %v443
        %v543 = vunpack.c.l.b16 %v457
        %v544 = vunpack.c.l.b16 %v471
        %v545 = vunpack.c.l.b16 %v485
        %v546 = vunpack.c.l.b16 %v499
        %v547 = vunpack.c.l.b16 %v513
        %v548 = vunpack.c.l.b16 %v527
        %v549 = vunpack.c.l.b16 %v541
        %v550 = vpack.c.b16 %v543, %v542
        %v551 = vpack.c.b16 %v545, %v544
        %v552 = vpack.c.b16 %v547, %v546
        %v553 = vpack.c.b16 %v549, %v548
        %vm554 = vcmask 31744
        %v556 = vsel %vm554, %v550, 0
        %v559 = vsel %vm554, %v551, 0
        %v562 = vsel %vm554, %v552, 0
        %v565 = vsel %vm554, %v553, 0
        %vm567 = vcmask 1041408
        %v569 = vsel %vm567, %v379, 0
        %571 = vmatprep.subr.bf16.mxu0 0
        %572 = vmatpush1.bf16.msra.mxu0 %v569
        %573 = vmatprep.subr.bf16.mxu0 0
        %574 = vmatpush1.bf16.msra.mxu0 0
        %575 = vmatprep.subr.bf16.mxu0 0
        %576 = vmatpush1.bf16.msra.mxu0 0
        %577 = vmatprep.subr.bf16.mxu0 0
        %578 = vmatpush1.bf16.msra.mxu0 0
        %579 = vmatprep.subr.bf16.mxu0 0
        %580 = vmatpush1.bf16.msra.mxu0 0
        %581 = vmatprep.subr.bf16.mxu0 0
        %582 = vmatpush1.bf16.msra.mxu0 0
        %583 = vmatprep.subr.bf16.mxu0 0
        %584 = vmatpush1.bf16.msra.mxu0 0
        %585 = vmatprep.subr.bf16.mxu0 0
        %586 = vmatpush1.bf16.msra.mxu0 0
        %587 = vmatprep.subr.bf16.mxu0 0
        %588 = vmatpush1.bf16.msra.mxu0 0
        %589 = vmatprep.subr.bf16.mxu0 0
        %590 = vmatpush1.bf16.msra.mxu0 0
        %591 = vmatprep.subr.bf16.mxu0 0
        %592 = vmatpush1.bf16.msra.mxu0 0
        %593 = vmatprep.subr.bf16.mxu0 0
        %594 = vmatpush1.bf16.msra.mxu0 0
        %595 = vmatprep.subr.bf16.mxu0 0
        %596 = vmatpush1.bf16.msra.mxu0 0
        %597 = vmatprep.subr.bf16.mxu0 0
        %598 = vmatpush1.bf16.msra.mxu0 0
        %599 = vmatprep.subr.bf16.mxu0 0
        %600 = vmatpush1.bf16.msra.mxu0 0
        %601 = vmatprep.subr.bf16.mxu0 0
        %602 = vmatpush1.bf16.msra.mxu0 0
        %603 = vmatprep.mubr.bf16.mxu0 0
        %604 = vmatmul.mubr.bf16.gmra.mrb[0].mxu0 %v556
        %v605 = vpop.f32.mrb[0].mxu0
        %v606 = vadd.f32 0.0, %v605
        %v607 = vpop.f32.mrb[0].mxu0
        %v608 = vpop.f32.mrb[0].mxu0
        %v609 = vadd.f32 0.0, %v608
        %v610 = vpop.f32.mrb[0].mxu0
        %611 = vmatprep.mubr.bf16.mxu0 0
        %612 = vmatmul.mubr.bf16.gmra.mrb[0].mxu0 %v559
        %v613 = vpop.f32.mrb[0].mxu0
        %v614 = vadd.f32 0.0, %v613
        %v615 = vpop.f32.mrb[0].mxu0
        %v616 = vpop.f32.mrb[0].mxu0
        %v617 = vadd.f32 0.0, %v616
        %v618 = vpop.f32.mrb[0].mxu0
        %619 = vmatprep.mubr.bf16.mxu0 0
        %620 = vmatmul.mubr.bf16.gmra.mrb[0].mxu0 %v562
        %v621 = vpop.f32.mrb[0].mxu0
        %v622 = vadd.f32 0.0, %v621
        %v623 = vpop.f32.mrb[0].mxu0
        %v624 = vpop.f32.mrb[0].mxu0
        %v625 = vadd.f32 0.0, %v624
        %v626 = vpop.f32.mrb[0].mxu0
        %627 = vmatprep.mubr.bf16.mxu0 0
        %628 = vmatmul.mubr.bf16.gmra.mrb[0].mxu0 %v565
        %v629 = vpop.f32.mrb[0].mxu0
        %v630 = vadd.f32 0.0, %v629
        %v631 = vpop.f32.mrb[0].mxu0
        %v632 = vpop.f32.mrb[0].mxu0
        %v633 = vadd.f32 0.0, %v632
        %v634 = vpop.f32.mrb[0].mxu0
        %635 = vdwg.mxu0
        %v636 = vpack.c.b16 %v397, %v395
        %v637 = vpack.c.b16 %v401, %v399
        %v638 = vpack.c.b16 %v405, %v403
        %v639 = vpack.c.b16 %v409, %v407
        %v641 = vsel %vm554, %v636, 0
        %v644 = vsel %vm554, %v637, 0
        %v647 = vsel %vm554, %v638, 0
        %v650 = vsel %vm554, %v639, 0
        %v653 = vsel %vm567, %v378, 0
        %655 = vmatprep.subr.bf16.mxu0 0
        %656 = vmatpush1.bf16.msra.mxu0 %v653
        %657 = vmatprep.subr.bf16.mxu0 0
        %658 = vmatpush1.bf16.msra.mxu0 0
        %659 = vmatprep.subr.bf16.mxu0 0
        %660 = vmatpush1.bf16.msra.mxu0 0
        %661 = vmatprep.subr.bf16.mxu0 0
        %662 = vmatpush1.bf16.msra.mxu0 0
        %663 = vmatprep.subr.bf16.mxu0 0
        %664 = vmatpush1.bf16.msra.mxu0 0
        %665 = vmatprep.subr.bf16.mxu0 0
        %666 = vmatpush1.bf16.msra.mxu0 0
        %667 = vmatprep.subr.bf16.mxu0 0
        %668 = vmatpush1.bf16.msra.mxu0 0
        %669 = vmatprep.subr.bf16.mxu0 0
        %670 = vmatpush1.bf16.msra.mxu0 0
        %671 = vmatprep.subr.bf16.mxu0 0
        %672 = vmatpush1.bf16.msra.mxu0 0
        %673 = vmatprep.subr.bf16.mxu0 0
        %674 = vmatpush1.bf16.msra.mxu0 0
        %675 = vmatprep.subr.bf16.mxu0 0
        %676 = vmatpush1.bf16.msra.mxu0 0
        %677 = vmatprep.subr.bf16.mxu0 0
        %678 = vmatpush1.bf16.msra.mxu0 0
        %679 = vmatprep.subr.bf16.mxu0 0
        %680 = vmatpush1.bf16.msra.mxu0 0
        %681 = vmatprep.subr.bf16.mxu0 0
        %682 = vmatpush1.bf16.msra.mxu0 0
        %683 = vmatprep.subr.bf16.mxu0 0
        %684 = vmatpush1.bf16.msra.mxu0 0
        %685 = vmatprep.subr.bf16.mxu0 0
        %686 = vmatpush1.bf16.msra.mxu0 0
        %687 = vmatprep.mubr.bf16.mxu0 0
        %688 = vmatmul.mubr.bf16.gmra.mrb[0].mxu0 %v641
        %v689 = vpop.f32.mrb[0].mxu0
        %v690 = vadd.f32 %v606, %v689
        %v691 = vpop.f32.mrb[0].mxu0
        %v692 = vpop.f32.mrb[0].mxu0
        %v693 = vadd.f32 %v609, %v692
        %v694 = vpop.f32.mrb[0].mxu0
        %695 = vmatprep.mubr.bf16.mxu0 0
        %696 = vmatmul.mubr.bf16.gmra.mrb[0].mxu0 %v644
        %v697 = vpop.f32.mrb[0].mxu0
        %v698 = vadd.f32 %v614, %v697
        %v699 = vpop.f32.mrb[0].mxu0
        %v700 = vpop.f32.mrb[0].mxu0
        %v701 = vadd.f32 %v617, %v700
        %v702 = vpop.f32.mrb[0].mxu0
        %703 = vmatprep.mubr.bf16.mxu0 0
        %704 = vmatmul.mubr.bf16.gmra.mrb[0].mxu0 %v647
        %v705 = vpop.f32.mrb[0].mxu0
        %v706 = vadd.f32 %v622, %v705
        %v707 = vpop.f32.mrb[0].mxu0
        %v708 = vpop.f32.mrb[0].mxu0
        %v709 = vadd.f32 %v625, %v708
        %v710 = vpop.f32.mrb[0].mxu0
        %711 = vmatprep.mubr.bf16.mxu0 0
        %712 = vmatmul.mubr.bf16.gmra.mrb[0].mxu0 %v650
        %v713 = vpop.f32.mrb[0].mxu0
        %v714 = vadd.f32 %v630, %v713
        %v715 = vpop.f32.mrb[0].mxu0
        %v716 = vpop.f32.mrb[0].mxu0
        %v717 = vadd.f32 %v633, %v716
        %v718 = vpop.f32.mrb[0].mxu0
        %719 = vdwg.mxu0
        %vm720 = vcmask 1042432
        %vm721 = vcmask 1046532
        %vm722 = vmor %vm720, %vm721
        %v723 = vrot.slane %v411, 5
        %v724 = vrot.slane %v723, 4
        %v725 = vrot.slane %v412, 5
        %v726 = vsel %vm722, %v724, %v725
        %v727 = vrot.slane %v413, 5
        %v728 = vrot.slane %v727, 4
        %v729 = vrot.slane %v414, 5
        %v730 = vsel %vm722, %v728, %v729
        %v731 = vrot.slane %v415, 5
        %v732 = vrot.slane %v731, 4
        %v733 = vrot.slane %v416, 5
        %v734 = vsel %vm722, %v732, %v733
        %v735 = vrot.slane %v417, 5
        %v736 = vrot.slane %v735, 4
        %v737 = vrot.slane %v418, 5
        %v738 = vsel %vm722, %v736, %v737
        %v739 = vrot.slane %v419, 5
        %v740 = vrot.slane %v739, 4
        %v741 = vrot.slane %v420, 5
        %v742 = vsel %vm722, %v740, %v741
        %v743 = vrot.slane %v421, 5
        %v744 = vrot.slane %v743, 4
        %v745 = vrot.slane %v422, 5
        %v746 = vsel %vm722, %v744, %v745
        %v747 = vrot.slane %v423, 5
        %v748 = vrot.slane %v747, 4
        %v749 = vrot.slane %v424, 5
        %v750 = vsel %vm722, %v748, %v749
        %v751 = vrot.slane %v425, 5
        %v752 = vrot.slane %v751, 4
        %v753 = vrot.slane %v426, 5
        %v754 = vsel %vm722, %v752, %v753
        %v755 = vunpack.c.l.b16 %v726
        %v756 = vunpack.c.l.b16 %v730
        %v757 = vunpack.c.l.b16 %v734
        %v758 = vunpack.c.l.b16 %v738
        %v759 = vunpack.c.l.b16 %v742
        %v760 = vunpack.c.l.b16 %v746
        %v761 = vunpack.c.l.b16 %v750
        %v762 = vunpack.c.l.b16 %v754
        %v763 = vpack.c.b16 %v756, %v755
        %v764 = vpack.c.b16 %v758, %v757
        %v765 = vpack.c.b16 %v760, %v759
        %v766 = vpack.c.b16 %v762, %v761
        %v768 = vsel %vm554, %v763, 0
        %v771 = vsel %vm554, %v764, 0
        %v774 = vsel %vm554, %v765, 0
        %v777 = vsel %vm554, %v766, 0
        %v780 = vsel %vm567, %v380, 0
        %782 = vmatprep.subr.bf16.mxu0 0
        %783 = vmatpush1.bf16.msra.mxu0 %v780
        %784 = vmatprep.subr.bf16.mxu0 0
        %785 = vmatpush1.bf16.msra.mxu0 0
        %786 = vmatprep.subr.bf16.mxu0 0
        %787 = vmatpush1.bf16.msra.mxu0 0
        %788 = vmatprep.subr.bf16.mxu0 0
        %789 = vmatpush1.bf16.msra.mxu0 0
        %790 = vmatprep.subr.bf16.mxu0 0
        %791 = vmatpush1.bf16.msra.mxu0 0
        %792 = vmatprep.subr.bf16.mxu0 0
        %793 = vmatpush1.bf16.msra.mxu0 0
        %794 = vmatprep.subr.bf16.mxu0 0
        %795 = vmatpush1.bf16.msra.mxu0 0
        %796 = vmatprep.subr.bf16.mxu0 0
        %797 = vmatpush1.bf16.msra.mxu0 0
        %798 = vmatprep.subr.bf16.mxu0 0
        %799 = vmatpush1.bf16.msra.mxu0 0
        %800 = vmatprep.subr.bf16.mxu0 0
        %801 = vmatpush1.bf16.msra.mxu0 0
        %802 = vmatprep.subr.bf16.mxu0 0
        %803 = vmatpush1.bf16.msra.mxu0 0
        %804 = vmatprep.subr.bf16.mxu0 0
        %805 = vmatpush1.bf16.msra.mxu0 0
        %806 = vmatprep.subr.bf16.mxu0 0
        %807 = vmatpush1.bf16.msra.mxu0 0
        %808 = vmatprep.subr.bf16.mxu0 0
        %809 = vmatpush1.bf16.msra.mxu0 0
        %810 = vmatprep.subr.bf16.mxu0 0
        %811 = vmatpush1.bf16.msra.mxu0 0
        %812 = vmatprep.subr.bf16.mxu0 0
        %813 = vmatpush1.bf16.msra.mxu0 0
        %814 = vmatprep.mubr.bf16.mxu0 0
        %815 = vmatmul.mubr.bf16.gmra.mrb[0].mxu0 %v768
        %v816 = vpop.f32.mrb[0].mxu0
        %v817 = vadd.f32 0.0, %v816
        %v818 = vpop.f32.mrb[0].mxu0
        %v819 = vpop.f32.mrb[0].mxu0
        %v820 = vadd.f32 0.0, %v819
        %v821 = vpop.f32.mrb[0].mxu0
        %822 = vmatprep.mubr.bf16.mxu0 0
        %823 = vmatmul.mubr.bf16.gmra.mrb[0].mxu0 %v771
        %v824 = vpop.f32.mrb[0].mxu0
        %v825 = vadd.f32 0.0, %v824
        %v826 = vpop.f32.mrb[0].mxu0
        %v827 = vpop.f32.mrb[0].mxu0
        %v828 = vadd.f32 0.0, %v827
        %v829 = vpop.f32.mrb[0].mxu0
        %830 = vmatprep.mubr.bf16.mxu0 0
        %831 = vmatmul.mubr.bf16.gmra.mrb[0].mxu0 %v774
        %v832 = vpop.f32.mrb[0].mxu0
        %v833 = vadd.f32 0.0, %v832
        %v834 = vpop.f32.mrb[0].mxu0
        %v835 = vpop.f32.mrb[0].mxu0
        %v836 = vadd.f32 0.0, %v835
        %v837 = vpop.f32.mrb[0].mxu0
        %838 = vmatprep.mubr.bf16.mxu0 0
        %839 = vmatmul.mubr.bf16.gmra.mrb[0].mxu0 %v777
        %v840 = vpop.f32.mrb[0].mxu0
        %v841 = vadd.f32 0.0, %v840
        %v842 = vpop.f32.mrb[0].mxu0
        %v843 = vpop.f32.mrb[0].mxu0
        %v844 = vadd.f32 0.0, %v843
        %v845 = vpop.f32.mrb[0].mxu0
        %846 = vdwg.mxu0
        %v847 = vadd.f32 %v690, %v817
        %v848 = vadd.f32 %v693, %v820
        %v849 = vadd.f32 %v698, %v825
        %v850 = vadd.f32 %v701, %v828
        %v851 = vadd.f32 %v706, %v833
        %v852 = vadd.f32 %v709, %v836
        %v853 = vadd.f32 %v714, %v841
        %v854 = vadd.f32 %v717, %v844
        %v856 = vunpack.c.l.b16 %v377
        %v857 = vpack.c.b16 %v399, %v397
        %v858 = vpack.c.b16 %v403, %v401
        %v859 = vpack.c.b16 %v407, %v405
        %v860 = vpack.c.b16 %v856, %v409
        %v862 = vsel %vm554, %v857, 0
        %v865 = vsel %vm554, %v858, 0
        %v868 = vsel %vm554, %v859, 0
        %v871 = vsel %vm554, %v860, 0
        %v874 = vsel %vm567, %v381, 0
        %876 = vmatprep.subr.bf16.mxu0 0
        %877 = vmatpush1.bf16.msra.mxu0 %v874
        %878 = vmatprep.subr.bf16.mxu0 0
        %879 = vmatpush1.bf16.msra.mxu0 0
        %880 = vmatprep.subr.bf16.mxu0 0
        %881 = vmatpush1.bf16.msra.mxu0 0
        %882 = vmatprep.subr.bf16.mxu0 0
        %883 = vmatpush1.bf16.msra.mxu0 0
        %884 = vmatprep.subr.bf16.mxu0 0
        %885 = vmatpush1.bf16.msra.mxu0 0
        %886 = vmatprep.subr.bf16.mxu0 0
        %887 = vmatpush1.bf16.msra.mxu0 0
        %888 = vmatprep.subr.bf16.mxu0 0
        %889 = vmatpush1.bf16.msra.mxu0 0
        %890 = vmatprep.subr.bf16.mxu0 0
        %891 = vmatpush1.bf16.msra.mxu0 0
        %892 = vmatprep.subr.bf16.mxu0 0
        %893 = vmatpush1.bf16.msra.mxu0 0
        %894 = vmatprep.subr.bf16.mxu0 0
        %895 = vmatpush1.bf16.msra.mxu0 0
        %896 = vmatprep.subr.bf16.mxu0 0
        %897 = vmatpush1.bf16.msra.mxu0 0
        %898 = vmatprep.subr.bf16.mxu0 0
        %899 = vmatpush1.bf16.msra.mxu0 0
        %900 = vmatprep.subr.bf16.mxu0 0
        %901 = vmatpush1.bf16.msra.mxu0 0
        %902 = vmatprep.subr.bf16.mxu0 0
        %903 = vmatpush1.bf16.msra.mxu0 0
        %904 = vmatprep.subr.bf16.mxu0 0
        %905 = vmatpush1.bf16.msra.mxu0 0
        %906 = vmatprep.subr.bf16.mxu0 0
        %907 = vmatpush1.bf16.msra.mxu0 0
        %908 = vmatprep.mubr.bf16.mxu0 0
        %909 = vmatmul.mubr.bf16.gmra.mrb[0].mxu0 %v862
        %v910 = vpop.f32.mrb[0].mxu0
        %v911 = vadd.f32 0.0, %v910
        %v912 = vpop.f32.mrb[0].mxu0
        %v913 = vpop.f32.mrb[0].mxu0
        %v914 = vadd.f32 0.0, %v913
        %v915 = vpop.f32.mrb[0].mxu0
        %916 = vmatprep.mubr.bf16.mxu0 0
        %917 = vmatmul.mubr.bf16.gmra.mrb[0].mxu0 %v865
        %v918 = vpop.f32.mrb[0].mxu0
        %v919 = vadd.f32 0.0, %v918
        %v920 = vpop.f32.mrb[0].mxu0
        %v921 = vpop.f32.mrb[0].mxu0
        %v922 = vadd.f32 0.0, %v921
        %v923 = vpop.f32.mrb[0].mxu0
        %924 = vmatprep.mubr.bf16.mxu0 0
        %925 = vmatmul.mubr.bf16.gmra.mrb[0].mxu0 %v868
        %v926 = vpop.f32.mrb[0].mxu0
        %v927 = vadd.f32 0.0, %v926
        %v928 = vpop.f32.mrb[0].mxu0
        %v929 = vpop.f32.mrb[0].mxu0
        %v930 = vadd.f32 0.0, %v929
        %v931 = vpop.f32.mrb[0].mxu0
        %932 = vmatprep.mubr.bf16.mxu0 0
        %933 = vmatmul.mubr.bf16.gmra.mrb[0].mxu0 %v871
        %v934 = vpop.f32.mrb[0].mxu0
        %v935 = vadd.f32 0.0, %v934
        %v936 = vpop.f32.mrb[0].mxu0
        %v937 = vpop.f32.mrb[0].mxu0
        %v938 = vadd.f32 0.0, %v937
        %v939 = vpop.f32.mrb[0].mxu0
        %940 = vdwg.mxu0
        %v941 = vadd.f32 %v847, %v911
        %v942 = vadd.f32 %v848, %v914
        %v943 = vadd.f32 %v849, %v919
        %v944 = vadd.f32 %v850, %v922
        %v945 = vadd.f32 %v851, %v927
        %v946 = vadd.f32 %v852, %v930
        %v947 = vadd.f32 %v853, %v935
        %v948 = vadd.f32 %v854, %v938
        %v949 = vunpack.c.h.b16 %v377
        %v950 = vpack.c.b16 %v856, %v856
        %v951 = vpack.c.b16 %v949, %v949
        %v953 = vshrl.u32 %v950, 16
        %v955 = vrot.slane %v953, 4
        %v956 = vshll.u32 %v950, 16
        %v958 = vrot.slane %v956, 5
        %v959 = vor.u32 %v955, %v958
        %v960 = vrot.slane %v959, 4
        %v962 = vshll.u32 %v951, 16
        %v964 = vrot.slane %v962, 5
        %v965 = vsel %vm429, %v960, %v964
        %v966 = vunpack.c.l.b16 %v965
        %v967 = vpack.c.b16 %v544, %v543
        %v968 = vpack.c.b16 %v546, %v545
        %v969 = vpack.c.b16 %v548, %v547
        %v970 = vpack.c.b16 %v966, %v549
        %v972 = vsel %vm554, %v967, 0
        %v975 = vsel %vm554, %v968, 0
        %v978 = vsel %vm554, %v969, 0
        %v981 = vsel %vm554, %v970, 0
        %v984 = vsel %vm567, %v382, 0
        %986 = vmatprep.subr.bf16.mxu0 0
        %987 = vmatpush1.bf16.msra.mxu0 %v984
        %988 = vmatprep.subr.bf16.mxu0 0
        %989 = vmatpush1.bf16.msra.mxu0 0
        %990 = vmatprep.subr.bf16.mxu0 0
        %991 = vmatpush1.bf16.msra.mxu0 0
        %992 = vmatprep.subr.bf16.mxu0 0
        %993 = vmatpush1.bf16.msra.mxu0 0
        %994 = vmatprep.subr.bf16.mxu0 0
        %995 = vmatpush1.bf16.msra.mxu0 0
        %996 = vmatprep.subr.bf16.mxu0 0
        %997 = vmatpush1.bf16.msra.mxu0 0
        %998 = vmatprep.subr.bf16.mxu0 0
        %999 = vmatpush1.bf16.msra.mxu0 0
        %1000 = vmatprep.subr.bf16.mxu0 0
        %1001 = vmatpush1.bf16.msra.mxu0 0
        %1002 = vmatprep.subr.bf16.mxu0 0
        %1003 = vmatpush1.bf16.msra.mxu0 0
        %1004 = vmatprep.subr.bf16.mxu0 0
        %1005 = vmatpush1.bf16.msra.mxu0 0
        %1006 = vmatprep.subr.bf16.mxu0 0
        %1007 = vmatpush1.bf16.msra.mxu0 0
        %1008 = vmatprep.subr.bf16.mxu0 0
        %1009 = vmatpush1.bf16.msra.mxu0 0
        %1010 = vmatprep.subr.bf16.mxu0 0
        %1011 = vmatpush1.bf16.msra.mxu0 0
        %1012 = vmatprep.subr.bf16.mxu0 0
        %1013 = vmatpush1.bf16.msra.mxu0 0
        %1014 = vmatprep.subr.bf16.mxu0 0
        %1015 = vmatpush1.bf16.msra.mxu0 0
        %1016 = vmatprep.subr.bf16.mxu0 0
        %1017 = vmatpush1.bf16.msra.mxu0 0
        %1018 = vmatprep.mubr.bf16.mxu0 0
        %1019 = vmatmul.mubr.bf16.gmra.mrb[0].mxu0 %v972
        %v1020 = vpop.f32.mrb[0].mxu0
        %v1021 = vadd.f32 0.0, %v1020
        %v1022 = vpop.f32.mrb[0].mxu0
        %v1023 = vpop.f32.mrb[0].mxu0
        %v1024 = vadd.f32 0.0, %v1023
        %v1025 = vpop.f32.mrb[0].mxu0
        %1026 = vmatprep.mubr.bf16.mxu0 0
        %1027 = vmatmul.mubr.bf16.gmra.mrb[0].mxu0 %v975
        %v1028 = vpop.f32.mrb[0].mxu0
        %v1029 = vadd.f32 0.0, %v1028
        %v1030 = vpop.f32.mrb[0].mxu0
        %v1031 = vpop.f32.mrb[0].mxu0
        %v1032 = vadd.f32 0.0, %v1031
        %v1033 = vpop.f32.mrb[0].mxu0
        %1034 = vmatprep.mubr.bf16.mxu0 0
        %1035 = vmatmul.mubr.bf16.gmra.mrb[0].mxu0 %v978
        %v1036 = vpop.f32.mrb[0].mxu0
        %v1037 = vadd.f32 0.0, %v1036
        %v1038 = vpop.f32.mrb[0].mxu0
        %v1039 = vpop.f32.mrb[0].mxu0
        %v1040 = vadd.f32 0.0, %v1039
        %v1041 = vpop.f32.mrb[0].mxu0
        %1042 = vmatprep.mubr.bf16.mxu0 0
        %1043 = vmatmul.mubr.bf16.gmra.mrb[0].mxu0 %v981
        %v1044 = vpop.f32.mrb[0].mxu0
        %v1045 = vadd.f32 0.0, %v1044
        %v1046 = vpop.f32.mrb[0].mxu0
        %v1047 = vpop.f32.mrb[0].mxu0
        %v1048 = vadd.f32 0.0, %v1047
        %v1049 = vpop.f32.mrb[0].mxu0
        %1050 = vdwg.mxu0
        %v1051 = vadd.f32 %v941, %v1021
        %v1052 = vadd.f32 %v942, %v1024
        %v1053 = vadd.f32 %v943, %v1029
        %v1054 = vadd.f32 %v944, %v1032
        %v1055 = vadd.f32 %v945, %v1037
        %v1056 = vadd.f32 %v946, %v1040
        %v1057 = vadd.f32 %v947, %v1045
        %v1058 = vadd.f32 %v948, %v1048
        %v1059 = vrot.slane %v950, 5
        %v1060 = vrot.slane %v1059, 4
        %v1061 = vrot.slane %v951, 5
        %v1062 = vsel %vm722, %v1060, %v1061
        %v1063 = vunpack.c.l.b16 %v1062
        %v1064 = vpack.c.b16 %v757, %v756
        %v1065 = vpack.c.b16 %v759, %v758
        %v1066 = vpack.c.b16 %v761, %v760
        %v1067 = vpack.c.b16 %v1063, %v762
        %v1069 = vsel %vm554, %v1064, 0
        %v1072 = vsel %vm554, %v1065, 0
        %v1075 = vsel %vm554, %v1066, 0
        %v1078 = vsel %vm554, %v1067, 0
        %v1081 = vsel %vm567, %v383, 0
        %1083 = vmatprep.subr.bf16.mxu0 0
        %1084 = vmatpush1.bf16.msra.mxu0 %v1081
        %1085 = vmatprep.subr.bf16.mxu0 0
        %1086 = vmatpush1.bf16.msra.mxu0 0
        %1087 = vmatprep.subr.bf16.mxu0 0
        %1088 = vmatpush1.bf16.msra.mxu0 0
        %1089 = vmatprep.subr.bf16.mxu0 0
        %1090 = vmatpush1.bf16.msra.mxu0 0
        %1091 = vmatprep.subr.bf16.mxu0 0
        %1092 = vmatpush1.bf16.msra.mxu0 0
        %1093 = vmatprep.subr.bf16.mxu0 0
        %1094 = vmatpush1.bf16.msra.mxu0 0
        %1095 = vmatprep.subr.bf16.mxu0 0
        %1096 = vmatpush1.bf16.msra.mxu0 0
        %1097 = vmatprep.subr.bf16.mxu0 0
        %1098 = vmatpush1.bf16.msra.mxu0 0
        %1099 = vmatprep.subr.bf16.mxu0 0
        %1100 = vmatpush1.bf16.msra.mxu0 0
        %1101 = vmatprep.subr.bf16.mxu0 0
        %1102 = vmatpush1.bf16.msra.mxu0 0
        %1103 = vmatprep.subr.bf16.mxu0 0
        %1104 = vmatpush1.bf16.msra.mxu0 0
        %1105 = vmatprep.subr.bf16.mxu0 0
        %1106 = vmatpush1.bf16.msra.mxu0 0
        %1107 = vmatprep.subr.bf16.mxu0 0
        %1108 = vmatpush1.bf16.msra.mxu0 0
        %1109 = vmatprep.subr.bf16.mxu0 0
        %1110 = vmatpush1.bf16.msra.mxu0 0
        %1111 = vmatprep.subr.bf16.mxu0 0
        %1112 = vmatpush1.bf16.msra.mxu0 0
        %1113 = vmatprep.subr.bf16.mxu0 0
        %1114 = vmatpush1.bf16.msra.mxu0 0
        %1115 = vmatprep.mubr.bf16.mxu0 0
        %1116 = vmatmul.mubr.bf16.gmra.mrb[0].mxu0 %v1069
        %v1117 = vpop.f32.mrb[0].mxu0
        %v1118 = vadd.f32 0.0, %v1117
        %v1119 = vpop.f32.mrb[0].mxu0
        %v1120 = vpop.f32.mrb[0].mxu0
        %v1121 = vadd.f32 0.0, %v1120
        %v1122 = vpop.f32.mrb[0].mxu0
        %1123 = vmatprep.mubr.bf16.mxu0 0
        %1124 = vmatmul.mubr.bf16.gmra.mrb[0].mxu0 %v1072
        %v1125 = vpop.f32.mrb[0].mxu0
        %v1126 = vadd.f32 0.0, %v1125
        %v1127 = vpop.f32.mrb[0].mxu0
        %v1128 = vpop.f32.mrb[0].mxu0
        %v1129 = vadd.f32 0.0, %v1128
        %v1130 = vpop.f32.mrb[0].mxu0
        %1131 = vmatprep.mubr.bf16.mxu0 0
        %1132 = vmatmul.mubr.bf16.gmra.mrb[0].mxu0 %v1075
        %v1133 = vpop.f32.mrb[0].mxu0
        %v1134 = vadd.f32 0.0, %v1133
        %v1135 = vpop.f32.mrb[0].mxu0
        %v1136 = vpop.f32.mrb[0].mxu0
        %v1137 = vadd.f32 0.0, %v1136
        %v1138 = vpop.f32.mrb[0].mxu0
        %1139 = vmatprep.mubr.bf16.mxu0 0
        %1140 = vmatmul.mubr.bf16.gmra.mrb[0].mxu0 %v1078
        %v1141 = vpop.f32.mrb[0].mxu0
        %v1142 = vadd.f32 0.0, %v1141
        %v1143 = vpop.f32.mrb[0].mxu0
        %v1144 = vpop.f32.mrb[0].mxu0
        %v1145 = vadd.f32 0.0, %v1144
        %v1146 = vpop.f32.mrb[0].mxu0
        %1147 = vdwg.mxu0
        %v1148 = vadd.f32 %v1051, %v1118
        %v1149 = vadd.f32 %v1052, %v1121
        %v1150 = vadd.f32 %v1053, %v1126
        %v1151 = vadd.f32 %v1054, %v1129
        %v1152 = vadd.f32 %v1055, %v1134
        %v1153 = vadd.f32 %v1056, %v1137
        %v1154 = vadd.f32 %v1057, %v1142
        %v1155 = vadd.f32 %v1058, %v1145
        %v1156 = vpack.c.b16 %v395, %v856
        %v1158 = vsel %vm554, %v1156, 0
        %v1161 = vsel %vm567, %v384, 0
        %1163 = vmatprep.subr.bf16.mxu0 0
        %1164 = vmatpush1.bf16.msra.mxu0 %v1161
        %1165 = vmatprep.subr.bf16.mxu0 0
        %1166 = vmatpush1.bf16.msra.mxu0 0
        %1167 = vmatprep.subr.bf16.mxu0 0
        %1168 = vmatpush1.bf16.msra.mxu0 0
        %1169 = vmatprep.subr.bf16.mxu0 0
        %1170 = vmatpush1.bf16.msra.mxu0 0
        %1171 = vmatprep.subr.bf16.mxu0 0
        %1172 = vmatpush1.bf16.msra.mxu0 0
        %1173 = vmatprep.subr.bf16.mxu0 0
        %1174 = vmatpush1.bf16.msra.mxu0 0
        %1175 = vmatprep.subr.bf16.mxu0 0
        %1176 = vmatpush1.bf16.msra.mxu0 0
        %1177 = vmatprep.subr.bf16.mxu0 0
        %1178 = vmatpush1.bf16.msra.mxu0 0
        %1179 = vmatprep.subr.bf16.mxu0 0
        %1180 = vmatpush1.bf16.msra.mxu0 0
        %1181 = vmatprep.subr.bf16.mxu0 0
        %1182 = vmatpush1.bf16.msra.mxu0 0
        %1183 = vmatprep.subr.bf16.mxu0 0
        %1184 = vmatpush1.bf16.msra.mxu0 0
        %1185 = vmatprep.subr.bf16.mxu0 0
        %1186 = vmatpush1.bf16.msra.mxu0 0
        %1187 = vmatprep.subr.bf16.mxu0 0
        %1188 = vmatpush1.bf16.msra.mxu0 0
        %1189 = vmatprep.subr.bf16.mxu0 0
        %1190 = vmatpush1.bf16.msra.mxu0 0
        %1191 = vmatprep.subr.bf16.mxu0 0
        %1192 = vmatpush1.bf16.msra.mxu0 0
        %1193 = vmatprep.subr.bf16.mxu0 0
        %1194 = vmatpush1.bf16.msra.mxu0 0
        %1195 = vmatprep.mubr.bf16.mxu0 0
        %1196 = vmatmul.mubr.bf16.gmra.mrb[0].mxu0 %v644
        %v1197 = vpop.f32.mrb[0].mxu0
        %v1198 = vadd.f32 0.0, %v1197
        %v1199 = vpop.f32.mrb[0].mxu0
        %v1200 = vpop.f32.mrb[0].mxu0
        %v1201 = vadd.f32 0.0, %v1200
        %v1202 = vpop.f32.mrb[0].mxu0
        %1203 = vmatprep.mubr.bf16.mxu0 0
        %1204 = vmatmul.mubr.bf16.gmra.mrb[0].mxu0 %v647
        %v1205 = vpop.f32.mrb[0].mxu0
        %v1206 = vadd.f32 0.0, %v1205
        %v1207 = vpop.f32.mrb[0].mxu0
        %v1208 = vpop.f32.mrb[0].mxu0
        %v1209 = vadd.f32 0.0, %v1208
        %v1210 = vpop.f32.mrb[0].mxu0
        %1211 = vmatprep.mubr.bf16.mxu0 0
        %1212 = vmatmul.mubr.bf16.gmra.mrb[0].mxu0 %v650
        %v1213 = vpop.f32.mrb[0].mxu0
        %v1214 = vadd.f32 0.0, %v1213
        %v1215 = vpop.f32.mrb[0].mxu0
        %v1216 = vpop.f32.mrb[0].mxu0
        %v1217 = vadd.f32 0.0, %v1216
        %v1218 = vpop.f32.mrb[0].mxu0
        %1219 = vmatprep.mubr.bf16.mxu0 0
        %1220 = vmatmul.mubr.bf16.gmra.mrb[0].mxu0 %v1158
        %v1221 = vpop.f32.mrb[0].mxu0
        %v1222 = vadd.f32 0.0, %v1221
        %v1223 = vpop.f32.mrb[0].mxu0
        %v1224 = vpop.f32.mrb[0].mxu0
        %v1225 = vadd.f32 0.0, %v1224
        %v1226 = vpop.f32.mrb[0].mxu0
        %1227 = vdwg.mxu0
        %v1228 = vadd.f32 %v1148, %v1198
        %v1229 = vadd.f32 %v1149, %v1201
        %v1230 = vadd.f32 %v1150, %v1206
        %v1231 = vadd.f32 %v1151, %v1209
        %v1232 = vadd.f32 %v1152, %v1214
        %v1233 = vadd.f32 %v1153, %v1217
        %v1234 = vadd.f32 %v1154, %v1222
        %v1235 = vadd.f32 %v1155, %v1225
        %v1236 = vpack.c.b16 %v542, %v966
        %v1238 = vsel %vm554, %v1236, 0
        %v1241 = vsel %vm567, %v385, 0
        %1243 = vmatprep.subr.bf16.mxu0 0
        %1244 = vmatpush1.bf16.msra.mxu0 %v1241
        %1245 = vmatprep.subr.bf16.mxu0 0
        %1246 = vmatpush1.bf16.msra.mxu0 0
        %1247 = vmatprep.subr.bf16.mxu0 0
        %1248 = vmatpush1.bf16.msra.mxu0 0
        %1249 = vmatprep.subr.bf16.mxu0 0
        %1250 = vmatpush1.bf16.msra.mxu0 0
        %1251 = vmatprep.subr.bf16.mxu0 0
        %1252 = vmatpush1.bf16.msra.mxu0 0
        %1253 = vmatprep.subr.bf16.mxu0 0
        %1254 = vmatpush1.bf16.msra.mxu0 0
        %1255 = vmatprep.subr.bf16.mxu0 0
        %1256 = vmatpush1.bf16.msra.mxu0 0
        %1257 = vmatprep.subr.bf16.mxu0 0
        %1258 = vmatpush1.bf16.msra.mxu0 0
        %1259 = vmatprep.subr.bf16.mxu0 0
        %1260 = vmatpush1.bf16.msra.mxu0 0
        %1261 = vmatprep.subr.bf16.mxu0 0
        %1262 = vmatpush1.bf16.msra.mxu0 0
        %1263 = vmatprep.subr.bf16.mxu0 0
        %1264 = vmatpush1.bf16.msra.mxu0 0
        %1265 = vmatprep.subr.bf16.mxu0 0
        %1266 = vmatpush1.bf16.msra.mxu0 0
        %1267 = vmatprep.subr.bf16.mxu0 0
        %1268 = vmatpush1.bf16.msra.mxu0 0
        %1269 = vmatprep.subr.bf16.mxu0 0
        %1270 = vmatpush1.bf16.msra.mxu0 0
        %1271 = vmatprep.subr.bf16.mxu0 0
        %1272 = vmatpush1.bf16.msra.mxu0 0
        %1273 = vmatprep.subr.bf16.mxu0 0
        %1274 = vmatpush1.bf16.msra.mxu0 0
        %1275 = vmatprep.mubr.bf16.mxu0 0
        %1276 = vmatmul.mubr.bf16.gmra.mrb[0].mxu0 %v559
        %v1277 = vpop.f32.mrb[0].mxu0
        %v1278 = vadd.f32 0.0, %v1277
        %v1279 = vpop.f32.mrb[0].mxu0
        %v1280 = vpop.f32.mrb[0].mxu0
        %v1281 = vadd.f32 0.0, %v1280
        %v1282 = vpop.f32.mrb[0].mxu0
        %1283 = vmatprep.mubr.bf16.mxu0 0
        %1284 = vmatmul.mubr.bf16.gmra.mrb[0].mxu0 %v562
        %v1285 = vpop.f32.mrb[0].mxu0
        %v1286 = vadd.f32 0.0, %v1285
        %v1287 = vpop.f32.mrb[0].mxu0
        %v1288 = vpop.f32.mrb[0].mxu0
        %v1289 = vadd.f32 0.0, %v1288
        %v1290 = vpop.f32.mrb[0].mxu0
        %1291 = vmatprep.mubr.bf16.mxu0 0
        %1292 = vmatmul.mubr.bf16.gmra.mrb[0].mxu0 %v565
        %v1293 = vpop.f32.mrb[0].mxu0
        %v1294 = vadd.f32 0.0, %v1293
        %v1295 = vpop.f32.mrb[0].mxu0
        %v1296 = vpop.f32.mrb[0].mxu0
        %v1297 = vadd.f32 0.0, %v1296
        %v1298 = vpop.f32.mrb[0].mxu0
        %1299 = vmatprep.mubr.bf16.mxu0 0
        %1300 = vmatmul.mubr.bf16.gmra.mrb[0].mxu0 %v1238
        %v1301 = vpop.f32.mrb[0].mxu0
        %v1302 = vadd.f32 0.0, %v1301
        %v1303 = vpop.f32.mrb[0].mxu0
        %v1304 = vpop.f32.mrb[0].mxu0
        %v1305 = vadd.f32 0.0, %v1304
        %v1306 = vpop.f32.mrb[0].mxu0
        %1307 = vdwg.mxu0
        %v1308 = vadd.f32 %v1228, %v1278
        %v1309 = vadd.f32 %v1229, %v1281
        %v1310 = vadd.f32 %v1230, %v1286
        %v1311 = vadd.f32 %v1231, %v1289
        %v1312 = vadd.f32 %v1232, %v1294
        %v1313 = vadd.f32 %v1233, %v1297
        %v1314 = vadd.f32 %v1234, %v1302
        %v1315 = vadd.f32 %v1235, %v1305
        %v1316 = vpack.c.b16 %v755, %v1063
        %v1318 = vsel %vm554, %v1316, 0
        %v1321 = vsel %vm567, %v386, 0
        %1323 = vmatprep.subr.bf16.mxu0 0
        %1324 = vmatpush1.bf16.msra.mxu0 %v1321
        %1325 = vmatprep.subr.bf16.mxu0 0
        %1326 = vmatpush1.bf16.msra.mxu0 0
        %1327 = vmatprep.subr.bf16.mxu0 0
        %1328 = vmatpush1.bf16.msra.mxu0 0
        %1329 = vmatprep.subr.bf16.mxu0 0
        %1330 = vmatpush1.bf16.msra.mxu0 0
        %1331 = vmatprep.subr.bf16.mxu0 0
        %1332 = vmatpush1.bf16.msra.mxu0 0
        %1333 = vmatprep.subr.bf16.mxu0 0
        %1334 = vmatpush1.bf16.msra.mxu0 0
        %1335 = vmatprep.subr.bf16.mxu0 0
        %1336 = vmatpush1.bf16.msra.mxu0 0
        %1337 = vmatprep.subr.bf16.mxu0 0
        %1338 = vmatpush1.bf16.msra.mxu0 0
        %1339 = vmatprep.subr.bf16.mxu0 0
        %1340 = vmatpush1.bf16.msra.mxu0 0
        %1341 = vmatprep.subr.bf16.mxu0 0
        %1342 = vmatpush1.bf16.msra.mxu0 0
        %1343 = vmatprep.subr.bf16.mxu0 0
        %1344 = vmatpush1.bf16.msra.mxu0 0
        %1345 = vmatprep.subr.bf16.mxu0 0
        %1346 = vmatpush1.bf16.msra.mxu0 0
        %1347 = vmatprep.subr.bf16.mxu0 0
        %1348 = vmatpush1.bf16.msra.mxu0 0
        %1349 = vmatprep.subr.bf16.mxu0 0
        %1350 = vmatpush1.bf16.msra.mxu0 0
        %1351 = vmatprep.subr.bf16.mxu0 0
        %1352 = vmatpush1.bf16.msra.mxu0 0
        %1353 = vmatprep.subr.bf16.mxu0 0
        %1354 = vmatpush1.bf16.msra.mxu0 0
        %1355 = vmatprep.mubr.bf16.mxu0 0
        %1356 = vmatmul.mubr.bf16.gmra.mrb[0].mxu0 %v771
        %v1357 = vpop.f32.mrb[0].mxu0
        %v1358 = vadd.f32 0.0, %v1357
        %v1359 = vpop.f32.mrb[0].mxu0
        %v1360 = vpop.f32.mrb[0].mxu0
        %v1361 = vadd.f32 0.0, %v1360
        %v1362 = vpop.f32.mrb[0].mxu0
        %1363 = vmatprep.mubr.bf16.mxu0 0
        %1364 = vmatmul.mubr.bf16.gmra.mrb[0].mxu0 %v774
        %v1365 = vpop.f32.mrb[0].mxu0
        %v1366 = vadd.f32 0.0, %v1365
        %v1367 = vpop.f32.mrb[0].mxu0
        %v1368 = vpop.f32.mrb[0].mxu0
        %v1369 = vadd.f32 0.0, %v1368
        %v1370 = vpop.f32.mrb[0].mxu0
        %1371 = vmatprep.mubr.bf16.mxu0 0
        %1372 = vmatmul.mubr.bf16.gmra.mrb[0].mxu0 %v777
        %v1373 = vpop.f32.mrb[0].mxu0
        %v1374 = vadd.f32 0.0, %v1373
        %v1375 = vpop.f32.mrb[0].mxu0
        %v1376 = vpop.f32.mrb[0].mxu0
        %v1377 = vadd.f32 0.0, %v1376
        %v1378 = vpop.f32.mrb[0].mxu0
        %1379 = vmatprep.mubr.bf16.mxu0 0
        %1380 = vmatmul.mubr.bf16.gmra.mrb[0].mxu0 %v1318
        %v1381 = vpop.f32.mrb[0].mxu0
        %v1382 = vadd.f32 0.0, %v1381
        %v1383 = vpop.f32.mrb[0].mxu0
        %v1384 = vpop.f32.mrb[0].mxu0
        %v1385 = vadd.f32 0.0, %v1384
        %v1386 = vpop.f32.mrb[0].mxu0
        %1387 = vdwg.mxu0
        %v1388 = vadd.f32 %v1308, %v1358
        %v1389 = vadd.f32 %v1309, %v1361
        %v1390 = vadd.f32 %v1310, %v1366
        %v1391 = vadd.f32 %v1311, %v1369
        %v1392 = vadd.f32 %v1312, %v1374
        %v1393 = vadd.f32 %v1313, %v1377
        %v1394 = vadd.f32 %v1314, %v1382
        %v1395 = vadd.f32 %v1315, %v1385
        %v1396 = vld [vmem:[%s2] sm:$0x1]
        %v1398 = vlaneseq
        %v1399 = vshrl.u32 %v1398, 7
        %v1400 = vsub.s32 0, %v1399
        %v1401 = vrot.slane %v1396, %v1400
        %v1403 = vadd.f32 %v1388, %v1401
        %v1404 = vadd.f32 %v1389, %v1401
        %v1405 = vadd.f32 %v1390, %v1401
        %v1406 = vadd.f32 %v1391, %v1401
        %v1407 = vadd.f32 %v1392, %v1401
        %v1408 = vadd.f32 %v1393, %v1401
        %v1409 = vadd.f32 %v1394, %v1401
        %v1410 = vadd.f32 %v1395, %v1401
        %1411 = vxpose.xlu0.b32.start [1/16] %v1403, 128
        %1412 = vxpose.xlu0.b32.cont [2/16] %v1404, 128
        %1413 = vxpose.xlu0.b32.cont [3/16] %v1405, 128
        %1414 = vxpose.xlu0.b32.cont [4/16] %v1406, 128
        %1415 = vxpose.xlu0.b32.cont [5/16] %v1407, 128
        %1416 = vxpose.xlu0.b32.cont [6/16] %v1408, 128
        %1417 = vxpose.xlu0.b32.cont [7/16] %v1409, 128
        %1418 = vxpose.xlu0.b32.cont [8/16] %v1410, 128
        %1419 = vxpose.xlu0.b32.cont [9/16] 0.0, 128
        %1420 = vxpose.xlu0.b32.cont [10/16] 0.0, 128
        %1421 = vxpose.xlu0.b32.cont [11/16] 0.0, 128
        %1422 = vxpose.xlu0.b32.cont [12/16] 0.0, 128
        %1423 = vxpose.xlu0.b32.cont [13/16] 0.0, 128
        %1424 = vxpose.xlu0.b32.cont [14/16] 0.0, 128
        %1425 = vxpose.xlu0.b32.cont [15/16] 0.0, 128
        %1426 = vxpose.xlu0.b32.end [16/16] 0.0, 128
        %v1427 = vpop.trf.xlu0
        %v1428 = vpop.trf.xlu0
        %v1429 = vpop.trf.xlu0
        %v1430 = vpop.trf.xlu0
        %v1431 = vpop.trf.xlu0
        %v1432 = vpop.trf.xlu0
        %v1433 = vpop.trf.xlu0
        %v1434 = vpop.trf.xlu0
        %v1435 = vpop.trf.xlu0
        %v1436 = vpop.trf.xlu0
        %v1437 = vpop.trf.xlu0
        %v1438 = vpop.trf.xlu0
        %v1439 = vpop.trf.xlu0
        %v1440 = vpop.trf.xlu0
        %v1441 = vpop.trf.xlu0
        %v1442 = vpop.trf.xlu0
        %vm1443 = vcmask 523264
        %1444 = vst.msk [vmem:[%s163] sm:$0xff] %vm1443, %v1427
        %s1445 = sand.u32 %s93, 1
        %s1446 = scalar_lea.sflag [#allocation3], %s1445
        %s1447 = sand.u32 %s93, 1
        %s1448 = smul.addr %s1447, 8
        %s1449 = scalar_lea.vmem [#allocation2], %s1448
        // Predicated region
        $region33: #{tpu_custom_call.1} parent=31 // pred_check
          %p1450 = pneg %p103
        $region34: #{tpu_custom_call.1} parent=31 // pred_check_branch
          %1452 = sbr.rel (%p1450) target = $region36
        $region35: #{tpu_custom_call.1} parent=31 // pred_region
          %s1454 = ssub.s32 128, 128
          %1455 = vsyncadd %s1446, %s1454
          %s1456 = smul.addr %s17, 128
          %s1457 = scalar_lea.hbm %s3, %s1456
          %s1459 = sshll.u32 %s1449, 4
          %s1460 = int_to_ptr.vmem [resolvable:$true] %s1459
          %1462 = dma.vmem_to_hbm [thread:$0]  %s1460, 128, %s1457, %s1446
        $region36: #{tpu_custom_call.1} parent=31 // pred_fallthru
          _
      $region32: #{tpu_custom_call.1} parent=5 // pred_fallthru
        _
      %p1463 = scmp.le.s32.totalorder 2, %s12
      // Predicated region
      $region37: #{tpu_custom_call.1} parent=5 // pred_check
        %p1464 = pneg %p1463
      $region38: #{tpu_custom_call.1} parent=5 // pred_check_branch
        %1466 = sbr.rel (%p1464) target = $region40
      $region39: #{tpu_custom_call.1} parent=5 // pred_region
        %s1467 = ssub.s32 %s12, 2
        // Predicated region
        $region41: #{tpu_custom_call.1} parent=39 // pred_check
          %p1468 = pneg %p109
        $region42: #{tpu_custom_call.1} parent=39 // pred_check_branch
          %1470 = sbr.rel (%p1468) target = $region44
        $region43: #{tpu_custom_call.1} parent=39 // pred_region
          %s1471 = sand.u32 %s94, 1
          %s1472 = scalar_lea.sflag [#allocation3], %s1471
          %s1473 = sand.u32 %s94, 1
          %s1474 = smul.addr %s1473, 8
          %s1475 = scalar_lea.vmem [#allocation2], %s1474
          %1476 = dma.done %s1472, 128
        $region44: #{tpu_custom_call.1} parent=39 // pred_fallthru
          _
      $region40: #{tpu_custom_call.1} parent=5 // pred_fallthru
        _
    $region6: #{tpu_custom_call.1} parent=1 // loop_footer
      %s16 = sadd.s32 1, %s12
    $region7: #{tpu_custom_call.1} parent=1 // loop_footer_branch
      %11 = sbr.rel target = $region3
    $region8: #{tpu_custom_call.1} parent=1 // loop_exit
      _
    %1477 = vsyncpa [#allocation3], 1
    %s1478 = scalar_lea.sflag [#allocation3], 1
    %1479 = vsyncpa %s1478, 1

</llo_original>
